<compile_context>
chip_gen: v5e
topology: v5e:2x2
jax: 0.10.0
libtpu: 0.0.40
codegen_flags: <defaults>
</compile_context>

<pallas_src>
import functools
import math

import jax
import jax.numpy as jnp
from jax.experimental import pallas as pl
from jax.experimental.pallas import tpu as pltpu


def _round_up(x, m):
    return ((x + m - 1) // m) * m


def _pick_tile(dim, prefs):
    for p in prefs:
        if dim % p == 0:
            return p
    return dim


def _pad2(a, rows, cols):
    return jnp.pad(a, ((0, rows - a.shape[0]), (0, cols - a.shape[1])))


_VMEM_LIMIT_CACHE = None


def _vmem_limit():
    """Per-generation scoped-VMEM limit: ~96 MiB on v5e/v6e, ~48 MiB on v7x."""
    global _VMEM_LIMIT_CACHE
    if _VMEM_LIMIT_CACHE is None:
        try:
            cap = pltpu.get_tpu_info().vmem_capacity_bytes
        except Exception:
            cap = 64 * 1024 * 1024
        _VMEM_LIMIT_CACHE = int(min(cap * 3 // 4, 100 * 1024 * 1024))
    return _VMEM_LIMIT_CACHE


# ---------------------------------------------------------------------------
# Kernel 1: one GCN propagation step with residual:  x_new = A_hat @ x + x0
#           grid (row tiles [parallel], K tiles [arbitrary]); bf16 MXU operands
# ---------------------------------------------------------------------------
def _prop_step_kernel(a_ref, x_ref, x0_ref, o_ref, acc_ref):
    k = pl.program_id(1)
    nk = pl.num_programs(1)

    @pl.when(k == 0)
    def _():
        acc_ref[...] = jnp.zeros_like(acc_ref)

    acc_ref[...] += jnp.dot(a_ref[...], x_ref[...], preferred_element_type=jnp.float32)

    @pl.when(k == nk - 1)
    def _():
        # residual to the *initial* features x0 (kept in f32)
        o_ref[...] = (acc_ref[...] + x0_ref[...]).astype(o_ref.dtype)


def _propagate_step(a_hat_bf16, x_cur_bf16, x0_f32):
    n_pad, f_pad = x0_f32.shape
    tm = _pick_tile(n_pad, (512, 256, 128, 8))
    tk = _pick_tile(n_pad, (1024, 512, 256, 128, 8))
    grid = (n_pad // tm, n_pad // tk)
    return pl.pallas_call(
        _prop_step_kernel,
        out_shape=jax.ShapeDtypeStruct((n_pad, f_pad), jnp.bfloat16),
        grid_spec=pltpu.PrefetchScalarGridSpec(
            num_scalar_prefetch=0,
            grid=grid,
            in_specs=[
                pl.BlockSpec((tm, tk), lambda i, k: (i, k)),      # A_hat tiles (bf16)
                pl.BlockSpec((tk, f_pad), lambda i, k: (k, 0)),   # current x (bf16)
                pl.BlockSpec((tm, f_pad), lambda i, k: (i, 0)),   # residual x0 (f32)
            ],
            out_specs=pl.BlockSpec((tm, f_pad), lambda i, k: (i, 0)),
            scratch_shapes=[pltpu.VMEM((tm, f_pad), jnp.float32)],  # K-reduction acc
        ),
        compiler_params=pltpu.CompilerParams(
            dimension_semantics=("parallel", "arbitrary"),
            vmem_limit_bytes=_vmem_limit(),
        ),
    )(a_hat_bf16, x_cur_bf16, x0_f32)


def propagate(a_hat_bf16, x0_f32, num_mps):
    x = x0_f32.astype(jnp.bfloat16)
    for _ in range(num_mps):
        x = _propagate_step(a_hat_bf16, x, x0_f32)
    return x


# ---------------------------------------------------------------------------
# Kernel 2a: Linear (x @ W + b) tiled over rows x cols x K, accumulating directly
#            into the f32 output block; per-row-tile column sum / sum-of-squares
#            (masked to the real N nodes) emitted for the two-pass BatchNorm.
# ---------------------------------------------------------------------------
def _linear_stats_kernel(x_ref, w_ref, b_ref, y_ref, st_ref, *, tm, n_valid):
    i = pl.program_id(0)
    k = pl.program_id(2)
    nk = pl.num_programs(2)

    @pl.when(k == 0)
    def _():
        y_ref[...] = jnp.zeros_like(y_ref)

    y_ref[...] += jnp.dot(x_ref[...], w_ref[...], preferred_element_type=jnp.float32)

    @pl.when(k == nk - 1)
    def _():
        y = y_ref[...] + b_ref[...]
        y_ref[...] = y
        # mask out padded rows so BN statistics use only the real N nodes
        rows = jax.lax.broadcasted_iota(jnp.int32, y.shape, 0) + i * tm
        mask = (rows < n_valid).astype(jnp.float32)
        ym = y * mask
        s = jnp.sum(ym, axis=0, keepdims=True)
        ss = jnp.sum(ym * ym, axis=0, keepdims=True)
        pad = jnp.zeros((6, y.shape[1]), jnp.float32)
        st_ref[...] = jnp.concatenate([s, ss, pad], axis=0).reshape(st_ref.shape)


# ---------------------------------------------------------------------------
# Kernel 2b: BatchNorm (batch stats, affine=False) + ReLU, elementwise, bf16 out
# ---------------------------------------------------------------------------
def _bn_relu_kernel(y_ref, mean_ref, rstd_ref, o_ref):
    y = (y_ref[...] - mean_ref[...]) * rstd_ref[...]
    o_ref[...] = jnp.maximum(y, 0.0).astype(o_ref.dtype)


def linear_bn_relu(x_bf16, w_bf16, b_f32, n_valid, eps=1e-10):
    n_pad, k_pad = x_bf16.shape
    h_pad = w_bf16.shape[1]
    tm = _pick_tile(n_pad, (512, 256, 128, 8))
    tn = _pick_tile(h_pad, (256, 128))
    tk = _pick_tile(k_pad, (512, 256, 128))
    ni, nj, nk = n_pad // tm, h_pad // tn, k_pad // tk

    y, stats = pl.pallas_call(
        functools.partial(_linear_stats_kernel, tm=tm, n_valid=n_valid),
        out_shape=(
            jax.ShapeDtypeStruct((n_pad, h_pad), jnp.float32),
            jax.ShapeDtypeStruct((ni, 8, h_pad), jnp.float32),
        ),
        grid_spec=pltpu.PrefetchScalarGridSpec(
            num_scalar_prefetch=0,
            grid=(ni, nj, nk),
            in_specs=[
                pl.BlockSpec((tm, tk), lambda i, j, k: (i, k)),
                pl.BlockSpec((tk, tn), lambda i, j, k: (k, j)),
                pl.BlockSpec((1, tn), lambda i, j, k: (0, j)),
            ],
            out_specs=(
                pl.BlockSpec((tm, tn), lambda i, j, k: (i, j)),
                pl.BlockSpec((1, 8, tn), lambda i, j, k: (i, 0, j)),
            ),
        ),
        compiler_params=pltpu.CompilerParams(
            dimension_semantics=("parallel", "parallel", "arbitrary"),
            vmem_limit_bytes=_vmem_limit(),
        ),
    )(x_bf16, w_bf16, b_f32)

    # tiny cross-row-tile reduction + mean/var in XLA (negligible cost)
    inv_n = 1.0 / float(n_valid)
    ssum = jnp.sum(stats[:, 0, :], axis=0)
    ssq = jnp.sum(stats[:, 1, :], axis=0)
    mean = ssum * inv_n
    var = jnp.maximum(ssq * inv_n - mean * mean, 0.0)   # biased variance (train-mode BN)
    rstd = jax.lax.rsqrt(var + eps)
    mean2d = mean[None, :].astype(jnp.float32)
    rstd2d = rstd[None, :].astype(jnp.float32)

    return pl.pallas_call(
        _bn_relu_kernel,
        out_shape=jax.ShapeDtypeStruct((n_pad, h_pad), jnp.bfloat16),
        grid_spec=pltpu.PrefetchScalarGridSpec(
            num_scalar_prefetch=0,
            grid=(ni, nj),
            in_specs=[
                pl.BlockSpec((tm, tn), lambda i, j: (i, j)),
                pl.BlockSpec((1, tn), lambda i, j: (0, j)),
                pl.BlockSpec((1, tn), lambda i, j: (0, j)),
            ],
            out_specs=pl.BlockSpec((tm, tn), lambda i, j: (i, j)),
        ),
        compiler_params=pltpu.CompilerParams(
            dimension_semantics=("parallel", "parallel"),
            vmem_limit_bytes=_vmem_limit(),
        ),
    )(y, mean2d, rstd2d)


# ---------------------------------------------------------------------------
# Kernel 3: plain Linear (final layer); accumulates directly into the f32 output
# ---------------------------------------------------------------------------
def _linear_kernel(x_ref, w_ref, b_ref, o_ref):
    k = pl.program_id(2)
    nk = pl.num_programs(2)

    @pl.when(k == 0)
    def _():
        o_ref[...] = jnp.zeros_like(o_ref)

    o_ref[...] += jnp.dot(x_ref[...], w_ref[...], preferred_element_type=jnp.float32)

    @pl.when(k == nk - 1)
    def _():
        o_ref[...] += b_ref[...]


def linear(x_bf16, w_bf16, b_f32):
    n_pad, k_pad = x_bf16.shape
    h_pad = w_bf16.shape[1]
    tm = _pick_tile(n_pad, (512, 256, 128, 8))
    tn = _pick_tile(h_pad, (256, 128))
    tk = _pick_tile(k_pad, (512, 256, 128))
    grid = (n_pad // tm, h_pad // tn, k_pad // tk)
    return pl.pallas_call(
        _linear_kernel,
        out_shape=jax.ShapeDtypeStruct((n_pad, h_pad), jnp.float32),
        grid_spec=pltpu.PrefetchScalarGridSpec(
            num_scalar_prefetch=0,
            grid=grid,
            in_specs=[
                pl.BlockSpec((tm, tk), lambda i, j, k: (i, k)),
                pl.BlockSpec((tk, tn), lambda i, j, k: (k, j)),
                pl.BlockSpec((1, tn), lambda i, j, k: (0, j)),
            ],
            out_specs=pl.BlockSpec((tm, tn), lambda i, j, k: (i, j)),
        ),
        compiler_params=pltpu.CompilerParams(
            dimension_semantics=("parallel", "parallel", "arbitrary"),
            vmem_limit_bytes=_vmem_limit(),
        ),
    )(x_bf16, w_bf16, b_f32)


# ---------------------------------------------------------------------------
# Glue: normalized adjacency, parameter init, full forward
# ---------------------------------------------------------------------------
def build_norm_adj(edge_index, num_nodes, n_pad):
    """Dense normalized adjacency A_hat[dst, src] = d_src^-1/2 * d_dst^-1/2 (bf16, padded)."""
    src, dst = edge_index[0], edge_index[1]
    deg = jnp.zeros((num_nodes,), jnp.float32).at[dst].add(1.0)
    d_inv_sqrt = jnp.where(deg > 0, deg ** -0.5, 0.0)
    w = d_inv_sqrt[src] * d_inv_sqrt[dst]
    a = jnp.zeros((n_pad, n_pad), jnp.float32).at[dst, src].add(w)
    return a.astype(jnp.bfloat16)   # degree products are well within bf16 precision


def xavier_uniform(key, fan_in, fan_out, gain=1.414):
    bound = gain * math.sqrt(6.0 / (fan_in + fan_out))
    # stored as [in, out] (transpose of PyTorch's [out, in]) so kernels do x @ W
    return jax.random.uniform(key, (fan_in, fan_out), jnp.float32, -bound, bound)


def init_params(key, in_channels, hidden_channels, out_channels, num_layers):
    dims = [in_channels] + [hidden_channels] * (num_layers - 1) + [out_channels]
    ws, bs = [], []
    for i in range(num_layers):
        key, sub = jax.random.split(key)
        ws.append(xavier_uniform(sub, dims[i], dims[i + 1]))
        bs.append(jnp.zeros((1, dims[i + 1]), jnp.float32))
    return ws, bs


def pmlp_sgcres_forward(x, edge_index, ws, bs, num_mps, use_conv=True):
    n, f_in = x.shape
    out_dim = ws[-1].shape[1]

    # Padding: N -> multiple of 512 (large A tiles / MXU alignment), features -> 128
    n_pad = _round_up(max(n, 8), 512)
    dims = [f_in] + [w.shape[1] for w in ws]
    dims_pad = [_round_up(d, 128) for d in dims]

    x_p = _pad2(x.astype(jnp.float32), n_pad, dims_pad[0])
    ws_p = [_pad2(w, dims_pad[i], dims_pad[i + 1]).astype(jnp.bfloat16)
            for i, w in enumerate(ws)]
    bs_p = [_pad2(b, 1, dims_pad[i + 1]).astype(jnp.float32) for i, b in enumerate(bs)]

    if use_conv and num_mps > 0:
        a_hat = build_norm_adj(edge_index, n, n_pad)
        h = propagate(a_hat, x_p, num_mps)          # bf16 activations
    else:
        h = x_p.astype(jnp.bfloat16)

    for i in range(len(ws) - 1):
        h = linear_bn_relu(h, ws_p[i], bs_p[i], n_valid=n)
        # F.dropout: identity (inference / training=False)
    out = linear(h, ws_p[-1], bs_p[-1])
    return out[:n, :out_dim]


if __name__ == "__main__":
    key = jax.random.PRNGKey(0)
    N, IN, HID, OUT = 8, 16, 32, 8
    NUM_LAYERS, NUM_MPS = 3, 2

    k_x, k_src, k_dst, k_w = jax.random.split(key, 4)
    x = jax.random.normal(k_x, (N, IN), jnp.float32)
    E = 24
    src = jax.random.randint(k_src, (E,), 0, N)
    dst = jax.random.randint(k_dst, (E,), 0, N)
    edge_index = jnp.stack([src, dst]).astype(jnp.int32)

    ws, bs = init_params(k_w, IN, HID, OUT, NUM_LAYERS)

    out = pmlp_sgcres_forward(x, edge_index, ws, bs, NUM_MPS, use_conv=True)
    out = jax.block_until_ready(out)
    assert out.shape == (N, OUT)
    assert bool(jnp.all(jnp.isfinite(out)))
    print("KERNEL_OK")
</pallas_src>

<mosaic_0001>
module attributes {stable_mosaic.version = 11 : i64} {
  func.func @_prop_step_kernel(%arg0: i32, %arg1: i32, %arg2: memref<512x512xbf16, #tpu.memory_space<vmem>>, %arg3: memref<512x128xbf16, #tpu.memory_space<vmem>>, %arg4: memref<512x128xf32, #tpu.memory_space<vmem>>, %arg5: memref<512x128xbf16, #tpu.memory_space<vmem>>, %arg6: memref<512x128xf32, #tpu.memory_space<vmem>>) attributes {dimension_semantics = [#tpu.dimension_semantics<parallel>, #tpu.dimension_semantics<arbitrary>], iteration_bounds = array<i64: 1, 1>, scalar_prefetch = 0 : i64, scratch_operands = 1 : i64, tpu.core_type = #tpu.core_type<tc>, window_params = [{transform_indices = @transform_0, window_bounds = array<i64: 512, 512>}, {transform_indices = @transform_1, window_bounds = array<i64: 512, 128>}, {transform_indices = @transform_2, window_bounds = array<i64: 512, 128>}, {transform_indices = @transform_3, window_bounds = array<i64: 512, 128>}]} {
    %c0_i32 = arith.constant 0 : i32
    %0 = arith.cmpi eq, %arg1, %c0_i32 : i32
    %1 = arith.extui %0 : i1 to i32
    %c0_i32_0 = arith.constant 0 : i32
    %2 = arith.cmpi ne, %1, %c0_i32_0 : i32
    scf.if %2 {
      %cst_10 = arith.constant 0.000000e+00 : f32
      %12 = vector.broadcast %cst_10 : f32 to vector<512x128xf32>
      %c0_11 = arith.constant 0 : index
      %c0_12 = arith.constant 0 : index
      %13 = vector.load %arg6[%c0_11, %c0_12] : memref<512x128xf32, #tpu.memory_space<vmem>>, vector<512x128xf32>
      tpu.vector_store %arg6[%c0_11, %c0_12], %12 {strides = array<i32>} : memref<512x128xf32, #tpu.memory_space<vmem>>, vector<512x128xf32>,
    } else {
    }
    %c0 = arith.constant 0 : index
    %c0_1 = arith.constant 0 : index
    %3 = vector.load %arg6[%c0, %c0_1] : memref<512x128xf32, #tpu.memory_space<vmem>>, vector<512x128xf32>
    %c0_2 = arith.constant 0 : index
    %c0_3 = arith.constant 0 : index
    %4 = vector.load %arg2[%c0_2, %c0_3] : memref<512x512xbf16, #tpu.memory_space<vmem>>, vector<512x512xbf16>
    %c0_4 = arith.constant 0 : index
    %c0_5 = arith.constant 0 : index
    %5 = vector.load %arg3[%c0_4, %c0_5] : memref<512x128xbf16, #tpu.memory_space<vmem>>, vector<512x128xbf16>
    %cst = arith.constant dense<0.000000e+00> : vector<512x128xf32>
    %6 = tpu.matmul %4, %5, %cst {dimension_numbers = #tpu.dot_dimension_numbers<[1], [0], [0], [1], [0, 0, 1, 1], [], []>} : vector<512x512xbf16>, vector<512x128xbf16>, vector<512x128xf32> -> vector<512x128xf32>
    %7 = arith.addf %3, %6 : vector<512x128xf32>
    %c0_6 = arith.constant 0 : index
    %c0_7 = arith.constant 0 : index
    %8 = vector.load %arg6[%c0_6, %c0_7] : memref<512x128xf32, #tpu.memory_space<vmem>>, vector<512x128xf32>
    tpu.vector_store %arg6[%c0_6, %c0_7], %7 {strides = array<i32>} : memref<512x128xf32, #tpu.memory_space<vmem>>, vector<512x128xf32>,
    %c0_i32_8 = arith.constant 0 : i32
    %9 = arith.cmpi eq, %arg1, %c0_i32_8 : i32
    %10 = arith.extui %9 : i1 to i32
    %c0_i32_9 = arith.constant 0 : i32
    %11 = arith.cmpi ne, %10, %c0_i32_9 : i32
    scf.if %11 {
      %c0_10 = arith.constant 0 : index
      %c0_11 = arith.constant 0 : index
      %12 = vector.load %arg6[%c0_10, %c0_11] : memref<512x128xf32, #tpu.memory_space<vmem>>, vector<512x128xf32>
      %c0_12 = arith.constant 0 : index
      %c0_13 = arith.constant 0 : index
      %13 = vector.load %arg4[%c0_12, %c0_13] : memref<512x128xf32, #tpu.memory_space<vmem>>, vector<512x128xf32>
      %14 = arith.addf %12, %13 : vector<512x128xf32>
      %15 = arith.truncf %14 : vector<512x128xf32> to vector<512x128xbf16>
      %c0_14 = arith.constant 0 : index
      %c0_15 = arith.constant 0 : index
      %16 = vector.load %arg5[%c0_14, %c0_15] : memref<512x128xbf16, #tpu.memory_space<vmem>>, vector<512x128xbf16>
      tpu.vector_store %arg5[%c0_14, %c0_15], %15 {strides = array<i32>} : memref<512x128xbf16, #tpu.memory_space<vmem>>, vector<512x128xbf16>,
    } else {
    }
    return
  }
  func.func @transform_0(%arg0: i32, %arg1: i32) -> (i32, i32) {
    %c0_i32 = arith.constant 0 : i32
    return %arg0, %arg1 : i32, i32
  }
  func.func @transform_1(%arg0: i32, %arg1: i32) -> (i32, i32) {
    %c0_i32 = arith.constant 0 : i32
    %c0_i32_0 = arith.constant 0 : i32
    return %arg1, %c0_i32 : i32, i32
  }
  func.func @transform_2(%arg0: i32, %arg1: i32) -> (i32, i32) {
    %c0_i32 = arith.constant 0 : i32
    %c0_i32_0 = arith.constant 0 : i32
    return %arg0, %c0_i32 : i32, i32
  }
  func.func @transform_3(%arg0: i32, %arg1: i32) -> (i32, i32) {
    %c0_i32 = arith.constant 0 : i32
    %c0_i32_0 = arith.constant 0 : i32
    return %arg0, %c0_i32 : i32, i32
  }
}

</mosaic_0001>

<llo_original>
// kernel: tpu_custom_call.1
$region0: #{tpu_custom_call.1}
  #allocation0 [shape = 'u32[]', space=smem, size = 0x4, offset = 0x4, fixed_abs, tag = 'smem constant byte address 0x4 - core index']
  #allocation1 [shape = 'u32[72,128]{1,0:T(1,128)}', space=vmem, size = 0x9000, scoped, tag = 'internal scratch']
  #allocation2 [shape = 'f32[512,128]{1,0:T(8,128)}', space=vmem, size = 0x40000, scoped, tag = 'scratch operand']
  %s0 = inlined_call_operand.hbm [shape: bf16[512,512], index: 0, kind: input, shape index: {}]
  %s1 = inlined_call_operand.hbm [shape: bf16[512,128], index: 1, kind: input, shape index: {}]
  %s2 = inlined_call_operand.hbm [shape: f32[512,128], index: 2, kind: input, shape index: {}]
  %s3 = inlined_call_operand.hbm [shape: bf16[512,128], index: 3, kind: output, shape index: {}]
  %s4 = sld [smem:[#allocation0]]
  $region42: #{tpu_custom_call.1} parent=0
    _
  %s6 = ssub.s32 1, %s4
  %s7 = scalar_select 0, %s6, %s4
  $region1: #{tpu_custom_call.1} parent=0
    #allocation3 [shape = 'u8[524288]{0}', space=vmem, size = 0x80000, scoped, tag = 'input window, operand 0, single buffered']
    #allocation4 [shape = 's32[1]{0}', space=sflag, size = 0x4, scoped, tag = 'scoped memory for tpu_custom_call.1']
    #allocation5 [shape = 's32[1]{0}', space=sflag, size = 0x4, scoped, tag = 'scoped memory for tpu_custom_call.1']
    #allocation6 [shape = 'u8[131072]{0}', space=vmem, size = 0x20000, scoped, tag = 'input window, operand 1, single buffered']
    #allocation7 [shape = 's32[1]{0}', space=sflag, size = 0x4, scoped, tag = 'scoped memory for tpu_custom_call.1']
    #allocation8 [shape = 'u8[262144]{0}', space=vmem, size = 0x40000, scoped, tag = 'input window, operand 2, single buffered']
    #allocation9 [shape = 'u8[131072]{0}', space=vmem, size = 0x20000, scoped, tag = 'output window, operand 0, single buffered']
    %8 = vsyncpa [#allocation4], 0
    %9 = vsyncpa [#allocation7], 0
    %10 = vsyncpa [#allocation5], 0
    // Predicated region
    $region2: #{tpu_custom_call.1} parent=1 // pred_check
      _
    $region3: #{tpu_custom_call.1} parent=1 // pred_check_branch
      %12 = sbr.rel (0) target = $region5
    $region4: #{tpu_custom_call.1} parent=1 // pred_region
      %14 = vsyncadd [#allocation4], 0
      %s15 = sshll.u32 %s0, 4
      %s16 = int_to_ptr.hbm [resolvable:$true] %s15
      %s17 = sshll.u32 [#allocation3], 4
      %s18 = int_to_ptr.vmem [resolvable:$true] %s17
      %23 = dma.hbm_to_vmem [thread:$0]  %s16, 16384, %s18, [#allocation4], 256, 256, 16
    $region5: #{tpu_custom_call.1} parent=1 // pred_fallthru
      _
    // Predicated region
    $region6: #{tpu_custom_call.1} parent=1 // pred_check
      _
    $region7: #{tpu_custom_call.1} parent=1 // pred_check_branch
      %25 = sbr.rel (0) target = $region9
    $region8: #{tpu_custom_call.1} parent=1 // pred_region
      %27 = vsyncadd [#allocation7], 0
      %s28 = sshll.u32 %s1, 4
      %s29 = int_to_ptr.hbm [resolvable:$true] %s28
      %s30 = sshll.u32 [#allocation6], 4
      %s31 = int_to_ptr.vmem [resolvable:$true] %s30
      %36 = dma.hbm_to_vmem [thread:$0]  %s29, 4096, %s31, [#allocation7], 64, 64, 4
    $region9: #{tpu_custom_call.1} parent=1 // pred_fallthru
      _
    // Predicated region
    $region10: #{tpu_custom_call.1} parent=1 // pred_check
      _
    $region11: #{tpu_custom_call.1} parent=1 // pred_check_branch
      %38 = sbr.rel (0) target = $region13
    $region12: #{tpu_custom_call.1} parent=1 // pred_region
      %40 = vsyncadd [#allocation7], 0
      %s41 = sshll.u32 %s2, 4
      %s42 = int_to_ptr.hbm [resolvable:$true] %s41
      %s43 = sshll.u32 [#allocation8], 4
      %s44 = int_to_ptr.vmem [resolvable:$true] %s43
      %49 = dma.hbm_to_vmem [thread:$0]  %s42, 8192, %s44, [#allocation7], 128, 128, 8
    $region13: #{tpu_custom_call.1} parent=1 // pred_fallthru
      _
    // Predicated region
    $region14: #{tpu_custom_call.1} parent=1 // pred_check
      _
    $region15: #{tpu_custom_call.1} parent=1 // pred_check_branch
      %51 = sbr.rel (0) target = $region17
    $region16: #{tpu_custom_call.1} parent=1 // pred_region
      %53 = dma.done [#allocation4], 16384
    $region17: #{tpu_custom_call.1} parent=1 // pred_fallthru
      _
    // Predicated region
    $region18: #{tpu_custom_call.1} parent=1 // pred_check
      _
    $region19: #{tpu_custom_call.1} parent=1 // pred_check_branch
      %55 = sbr.rel (0) target = $region21
    $region20: #{tpu_custom_call.1} parent=1 // pred_region
      %57 = dma.done [#allocation7], 4096
    $region21: #{tpu_custom_call.1} parent=1 // pred_fallthru
      _
    // Predicated region
    $region22: #{tpu_custom_call.1} parent=1 // pred_check
      _
    $region23: #{tpu_custom_call.1} parent=1 // pred_check_branch
      %59 = sbr.rel (0) target = $region25
    $region24: #{tpu_custom_call.1} parent=1 // pred_region
      %61 = dma.done [#allocation7], 8192
    $region25: #{tpu_custom_call.1} parent=1 // pred_fallthru
      _
    %p62 = scmp.eq.s32.totalorder 0, 0
    // Predicated region
    $region26: #{tpu_custom_call.1} parent=1 // pred_check
      %p63 = pneg %p62
    $region27: #{tpu_custom_call.1} parent=1 // pred_check_branch
      %65 = sbr.rel (%p63) target = $region29
    $region28: #{tpu_custom_call.1} parent=1 // pred_region
      %66 = vst [vmem:[#allocation2] sm:$0xff] 0.0
      %67 = vst [vmem:[#allocation2 + $0x8] sm:$0xff] 0.0
      %68 = vst [vmem:[#allocation2 + $0x10] sm:$0xff] 0.0
      %69 = vst [vmem:[#allocation2 + $0x18] sm:$0xff] 0.0
      %70 = vst [vmem:[#allocation2 + $0x20] sm:$0xff] 0.0
      %71 = vst [vmem:[#allocation2 + $0x28] sm:$0xff] 0.0
      %72 = vst [vmem:[#allocation2 + $0x30] sm:$0xff] 0.0
      %73 = vst [vmem:[#allocation2 + $0x38] sm:$0xff] 0.0
      %74 = vst [vmem:[#allocation2 + $0x40] sm:$0xff] 0.0
      %75 = vst [vmem:[#allocation2 + $0x48] sm:$0xff] 0.0
      %76 = vst [vmem:[#allocation2 + $0x50] sm:$0xff] 0.0
      %77 = vst [vmem:[#allocation2 + $0x58] sm:$0xff] 0.0
      %78 = vst [vmem:[#allocation2 + $0x60] sm:$0xff] 0.0
      %79 = vst [vmem:[#allocation2 + $0x68] sm:$0xff] 0.0
      %80 = vst [vmem:[#allocation2 + $0x70] sm:$0xff] 0.0
      %81 = vst [vmem:[#allocation2 + $0x78] sm:$0xff] 0.0
      %82 = vst [vmem:[#allocation2 + $0x80] sm:$0xff] 0.0
      %83 = vst [vmem:[#allocation2 + $0x88] sm:$0xff] 0.0
      %84 = vst [vmem:[#allocation2 + $0x90] sm:$0xff] 0.0
      %85 = vst [vmem:[#allocation2 + $0x98] sm:$0xff] 0.0
      %86 = vst [vmem:[#allocation2 + $0xa0] sm:$0xff] 0.0
      %87 = vst [vmem:[#allocation2 + $0xa8] sm:$0xff] 0.0
      %88 = vst [vmem:[#allocation2 + $0xb0] sm:$0xff] 0.0
      %89 = vst [vmem:[#allocation2 + $0xb8] sm:$0xff] 0.0
      %90 = vst [vmem:[#allocation2 + $0xc0] sm:$0xff] 0.0
      %91 = vst [vmem:[#allocation2 + $0xc8] sm:$0xff] 0.0
      %92 = vst [vmem:[#allocation2 + $0xd0] sm:$0xff] 0.0
      %93 = vst [vmem:[#allocation2 + $0xd8] sm:$0xff] 0.0
      %94 = vst [vmem:[#allocation2 + $0xe0] sm:$0xff] 0.0
      %95 = vst [vmem:[#allocation2 + $0xe8] sm:$0xff] 0.0
      %96 = vst [vmem:[#allocation2 + $0xf0] sm:$0xff] 0.0
      %97 = vst [vmem:[#allocation2 + $0xf8] sm:$0xff] 0.0
      %98 = vst [vmem:[#allocation2 + $0x100] sm:$0xff] 0.0
      %99 = vst [vmem:[#allocation2 + $0x108] sm:$0xff] 0.0
      %100 = vst [vmem:[#allocation2 + $0x110] sm:$0xff] 0.0
      %101 = vst [vmem:[#allocation2 + $0x118] sm:$0xff] 0.0
      %102 = vst [vmem:[#allocation2 + $0x120] sm:$0xff] 0.0
      %103 = vst [vmem:[#allocation2 + $0x128] sm:$0xff] 0.0
      %104 = vst [vmem:[#allocation2 + $0x130] sm:$0xff] 0.0
      %105 = vst [vmem:[#allocation2 + $0x138] sm:$0xff] 0.0
      %106 = vst [vmem:[#allocation2 + $0x140] sm:$0xff] 0.0
      %107 = vst [vmem:[#allocation2 + $0x148] sm:$0xff] 0.0
      %108 = vst [vmem:[#allocation2 + $0x150] sm:$0xff] 0.0
      %109 = vst [vmem:[#allocation2 + $0x158] sm:$0xff] 0.0
      %110 = vst [vmem:[#allocation2 + $0x160] sm:$0xff] 0.0
      %111 = vst [vmem:[#allocation2 + $0x168] sm:$0xff] 0.0
      %112 = vst [vmem:[#allocation2 + $0x170] sm:$0xff] 0.0
      %113 = vst [vmem:[#allocation2 + $0x178] sm:$0xff] 0.0
      %114 = vst [vmem:[#allocation2 + $0x180] sm:$0xff] 0.0
      %115 = vst [vmem:[#allocation2 + $0x188] sm:$0xff] 0.0
      %116 = vst [vmem:[#allocation2 + $0x190] sm:$0xff] 0.0
      %117 = vst [vmem:[#allocation2 + $0x198] sm:$0xff] 0.0
      %118 = vst [vmem:[#allocation2 + $0x1a0] sm:$0xff] 0.0
      %119 = vst [vmem:[#allocation2 + $0x1a8] sm:$0xff] 0.0
      %120 = vst [vmem:[#allocation2 + $0x1b0] sm:$0xff] 0.0
      %121 = vst [vmem:[#allocation2 + $0x1b8] sm:$0xff] 0.0
      %122 = vst [vmem:[#allocation2 + $0x1c0] sm:$0xff] 0.0
      %123 = vst [vmem:[#allocation2 + $0x1c8] sm:$0xff] 0.0
      %124 = vst [vmem:[#allocation2 + $0x1d0] sm:$0xff] 0.0
      %125 = vst [vmem:[#allocation2 + $0x1d8] sm:$0xff] 0.0
      %126 = vst [vmem:[#allocation2 + $0x1e0] sm:$0xff] 0.0
      %127 = vst [vmem:[#allocation2 + $0x1e8] sm:$0xff] 0.0
      %128 = vst [vmem:[#allocation2 + $0x1f0] sm:$0xff] 0.0
      %129 = vst [vmem:[#allocation2 + $0x1f8] sm:$0xff] 0.0
    $region29: #{tpu_custom_call.1} parent=1 // pred_fallthru
      _
    %v130 = vld [vmem:[#allocation2] sm:$0xff]
    %v131 = vld [vmem:[#allocation2 + $0x8] sm:$0xff]
    %v132 = vld [vmem:[#allocation2 + $0x10] sm:$0xff]
    %v133 = vld [vmem:[#allocation2 + $0x18] sm:$0xff]
    %v134 = vld [vmem:[#allocation2 + $0x20] sm:$0xff]
    %v135 = vld [vmem:[#allocation2 + $0x28] sm:$0xff]
    %v136 = vld [vmem:[#allocation2 + $0x30] sm:$0xff]
    %v137 = vld [vmem:[#allocation2 + $0x38] sm:$0xff]
    %v138 = vld [vmem:[#allocation2 + $0x40] sm:$0xff]
    %v139 = vld [vmem:[#allocation2 + $0x48] sm:$0xff]
    %v140 = vld [vmem:[#allocation2 + $0x50] sm:$0xff]
    %v141 = vld [vmem:[#allocation2 + $0x58] sm:$0xff]
    %v142 = vld [vmem:[#allocation2 + $0x60] sm:$0xff]
    %v143 = vld [vmem:[#allocation2 + $0x68] sm:$0xff]
    %v144 = vld [vmem:[#allocation2 + $0x70] sm:$0xff]
    %v145 = vld [vmem:[#allocation2 + $0x78] sm:$0xff]
    %v146 = vld [vmem:[#allocation2 + $0x80] sm:$0xff]
    %v147 = vld [vmem:[#allocation2 + $0x88] sm:$0xff]
    %v148 = vld [vmem:[#allocation2 + $0x90] sm:$0xff]
    %v149 = vld [vmem:[#allocation2 + $0x98] sm:$0xff]
    %v150 = vld [vmem:[#allocation2 + $0xa0] sm:$0xff]
    %v151 = vld [vmem:[#allocation2 + $0xa8] sm:$0xff]
    %v152 = vld [vmem:[#allocation2 + $0xb0] sm:$0xff]
    %v153 = vld [vmem:[#allocation2 + $0xb8] sm:$0xff]
    %v154 = vld [vmem:[#allocation2 + $0xc0] sm:$0xff]
    %v155 = vld [vmem:[#allocation2 + $0xc8] sm:$0xff]
    %v156 = vld [vmem:[#allocation2 + $0xd0] sm:$0xff]
    %v157 = vld [vmem:[#allocation2 + $0xd8] sm:$0xff]
    %v158 = vld [vmem:[#allocation2 + $0xe0] sm:$0xff]
    %v159 = vld [vmem:[#allocation2 + $0xe8] sm:$0xff]
    %v160 = vld [vmem:[#allocation2 + $0xf0] sm:$0xff]
    %v161 = vld [vmem:[#allocation2 + $0xf8] sm:$0xff]
    %v162 = vld [vmem:[#allocation2 + $0x100] sm:$0xff]
    %v163 = vld [vmem:[#allocation2 + $0x108] sm:$0xff]
    %v164 = vld [vmem:[#allocation2 + $0x110] sm:$0xff]
    %v165 = vld [vmem:[#allocation2 + $0x118] sm:$0xff]
    %v166 = vld [vmem:[#allocation2 + $0x120] sm:$0xff]
    %v167 = vld [vmem:[#allocation2 + $0x128] sm:$0xff]
    %v168 = vld [vmem:[#allocation2 + $0x130] sm:$0xff]
    %v169 = vld [vmem:[#allocation2 + $0x138] sm:$0xff]
    %v170 = vld [vmem:[#allocation2 + $0x140] sm:$0xff]
    %v171 = vld [vmem:[#allocation2 + $0x148] sm:$0xff]
    %v172 = vld [vmem:[#allocation2 + $0x150] sm:$0xff]
    %v173 = vld [vmem:[#allocation2 + $0x158] sm:$0xff]
    %v174 = vld [vmem:[#allocation2 + $0x160] sm:$0xff]
    %v175 = vld [vmem:[#allocation2 + $0x168] sm:$0xff]
    %v176 = vld [vmem:[#allocation2 + $0x170] sm:$0xff]
    %v177 = vld [vmem:[#allocation2 + $0x178] sm:$0xff]
    %v178 = vld [vmem:[#allocation2 + $0x180] sm:$0xff]
    %v179 = vld [vmem:[#allocation2 + $0x188] sm:$0xff]
    %v180 = vld [vmem:[#allocation2 + $0x190] sm:$0xff]
    %v181 = vld [vmem:[#allocation2 + $0x198] sm:$0xff]
    %v182 = vld [vmem:[#allocation2 + $0x1a0] sm:$0xff]
    %v183 = vld [vmem:[#allocation2 + $0x1a8] sm:$0xff]
    %v184 = vld [vmem:[#allocation2 + $0x1b0] sm:$0xff]
    %v185 = vld [vmem:[#allocation2 + $0x1b8] sm:$0xff]
    %v186 = vld [vmem:[#allocation2 + $0x1c0] sm:$0xff]
    %v187 = vld [vmem:[#allocation2 + $0x1c8] sm:$0xff]
    %v188 = vld [vmem:[#allocation2 + $0x1d0] sm:$0xff]
    %v189 = vld [vmem:[#allocation2 + $0x1d8] sm:$0xff]
    %v190 = vld [vmem:[#allocation2 + $0x1e0] sm:$0xff]
    %v191 = vld [vmem:[#allocation2 + $0x1e8] sm:$0xff]
    %v192 = vld [vmem:[#allocation2 + $0x1f0] sm:$0xff]
    %v193 = vld [vmem:[#allocation2 + $0x1f8] sm:$0xff]
    %v194 = vld [vmem:[#allocation3] sm:$0xff]
    %v195 = vld [vmem:[#allocation3 + $0x8] sm:$0xff]
    %v196 = vld [vmem:[#allocation3 + $0x10] sm:$0xff]
    %v197 = vld [vmem:[#allocation3 + $0x18] sm:$0xff]
    %v198 = vld [vmem:[#allocation3 + $0x20] sm:$0xff]
    %v199 = vld [vmem:[#allocation3 + $0x28] sm:$0xff]
    %v200 = vld [vmem:[#allocation3 + $0x30] sm:$0xff]
    %v201 = vld [vmem:[#allocation3 + $0x38] sm:$0xff]
    %v202 = vld [vmem:[#allocation3 + $0x40] sm:$0xff]
    %v203 = vld [vmem:[#allocation3 + $0x48] sm:$0xff]
    %v204 = vld [vmem:[#allocation3 + $0x50] sm:$0xff]
    %v205 = vld [vmem:[#allocation3 + $0x58] sm:$0xff]
    %v206 = vld [vmem:[#allocation3 + $0x60] sm:$0xff]
    %v207 = vld [vmem:[#allocation3 + $0x68] sm:$0xff]
    %v208 = vld [vmem:[#allocation3 + $0x70] sm:$0xff]
    %v209 = vld [vmem:[#allocation3 + $0x78] sm:$0xff]
    %v210 = vld [vmem:[#allocation3 + $0x80] sm:$0xff]
    %v211 = vld [vmem:[#allocation3 + $0x88] sm:$0xff]
    %v212 = vld [vmem:[#allocation3 + $0x90] sm:$0xff]
    %v213 = vld [vmem:[#allocation3 + $0x98] sm:$0xff]
    %v214 = vld [vmem:[#allocation3 + $0xa0] sm:$0xff]
    %v215 = vld [vmem:[#allocation3 + $0xa8] sm:$0xff]
    %v216 = vld [vmem:[#allocation3 + $0xb0] sm:$0xff]
    %v217 = vld [vmem:[#allocation3 + $0xb8] sm:$0xff]
    %v218 = vld [vmem:[#allocation3 + $0xc0] sm:$0xff]
    %v219 = vld [vmem:[#allocation3 + $0xc8] sm:$0xff]
    %v220 = vld [vmem:[#allocation3 + $0xd0] sm:$0xff]
    %v221 = vld [vmem:[#allocation3 + $0xd8] sm:$0xff]
    %v222 = vld [vmem:[#allocation3 + $0xe0] sm:$0xff]
    %v223 = vld [vmem:[#allocation3 + $0xe8] sm:$0xff]
    %v224 = vld [vmem:[#allocation3 + $0xf0] sm:$0xff]
    %v225 = vld [vmem:[#allocation3 + $0xf8] sm:$0xff]
    %v226 = vld [vmem:[#allocation3 + $0x100] sm:$0xff]
    %v227 = vld [vmem:[#allocation3 + $0x108] sm:$0xff]
    %v228 = vld [vmem:[#allocation3 + $0x110] sm:$0xff]
    %v229 = vld [vmem:[#allocation3 + $0x118] sm:$0xff]
    %v230 = vld [vmem:[#allocation3 + $0x120] sm:$0xff]
    %v231 = vld [vmem:[#allocation3 + $0x128] sm:$0xff]
    %v232 = vld [vmem:[#allocation3 + $0x130] sm:$0xff]
    %v233 = vld [vmem:[#allocation3 + $0x138] sm:$0xff]
    %v234 = vld [vmem:[#allocation3 + $0x140] sm:$0xff]
    %v235 = vld [vmem:[#allocation3 + $0x148] sm:$0xff]
    %v236 = vld [vmem:[#allocation3 + $0x150] sm:$0xff]
    %v237 = vld [vmem:[#allocation3 + $0x158] sm:$0xff]
    %v238 = vld [vmem:[#allocation3 + $0x160] sm:$0xff]
    %v239 = vld [vmem:[#allocation3 + $0x168] sm:$0xff]
    %v240 = vld [vmem:[#allocation3 + $0x170] sm:$0xff]
    %v241 = vld [vmem:[#allocation3 + $0x178] sm:$0xff]
    %v242 = vld [vmem:[#allocation3 + $0x180] sm:$0xff]
    %v243 = vld [vmem:[#allocation3 + $0x188] sm:$0xff]
    %v244 = vld [vmem:[#allocation3 + $0x190] sm:$0xff]
    %v245 = vld [vmem:[#allocation3 + $0x198] sm:$0xff]
    %v246 = vld [vmem:[#allocation3 + $0x1a0] sm:$0xff]
    %v247 = vld [vmem:[#allocation3 + $0x1a8] sm:$0xff]
    %v248 = vld [vmem:[#allocation3 + $0x1b0] sm:$0xff]
    %v249 = vld [vmem:[#allocation3 + $0x1b8] sm:$0xff]
    %v250 = vld [vmem:[#allocation3 + $0x1c0] sm:$0xff]
    %v251 = vld [vmem:[#allocation3 + $0x1c8] sm:$0xff]
    %v252 = vld [vmem:[#allocation3 + $0x1d0] sm:$0xff]
    %v253 = vld [vmem:[#allocation3 + $0x1d8] sm:$0xff]
    %v254 = vld [vmem:[#allocation3 + $0x1e0] sm:$0xff]
    %v255 = vld [vmem:[#allocation3 + $0x1e8] sm:$0xff]
    %v256 = vld [vmem:[#allocation3 + $0x1f0] sm:$0xff]
    %v257 = vld [vmem:[#allocation3 + $0x1f8] sm:$0xff]
    %v258 = vld [vmem:[#allocation3 + $0x200] sm:$0xff]
    %v259 = vld [vmem:[#allocation3 + $0x208] sm:$0xff]
    %v260 = vld [vmem:[#allocation3 + $0x210] sm:$0xff]
    %v261 = vld [vmem:[#allocation3 + $0x218] sm:$0xff]
    %v262 = vld [vmem:[#allocation3 + $0x220] sm:$0xff]
    %v263 = vld [vmem:[#allocation3 + $0x228] sm:$0xff]
    %v264 = vld [vmem:[#allocation3 + $0x230] sm:$0xff]
    %v265 = vld [vmem:[#allocation3 + $0x238] sm:$0xff]
    %v266 = vld [vmem:[#allocation3 + $0x240] sm:$0xff]
    %v267 = vld [vmem:[#allocation3 + $0x248] sm:$0xff]
    %v268 = vld [vmem:[#allocation3 + $0x250] sm:$0xff]
    %v269 = vld [vmem:[#allocation3 + $0x258] sm:$0xff]
    %v270 = vld [vmem:[#allocation3 + $0x260] sm:$0xff]
    %v271 = vld [vmem:[#allocation3 + $0x268] sm:$0xff]
    %v272 = vld [vmem:[#allocation3 + $0x270] sm:$0xff]
    %v273 = vld [vmem:[#allocation3 + $0x278] sm:$0xff]
    %v274 = vld [vmem:[#allocation3 + $0x280] sm:$0xff]
    %v275 = vld [vmem:[#allocation3 + $0x288] sm:$0xff]
    %v276 = vld [vmem:[#allocation3 + $0x290] sm:$0xff]
    %v277 = vld [vmem:[#allocation3 + $0x298] sm:$0xff]
    %v278 = vld [vmem:[#allocation3 + $0x2a0] sm:$0xff]
    %v279 = vld [vmem:[#allocation3 + $0x2a8] sm:$0xff]
    %v280 = vld [vmem:[#allocation3 + $0x2b0] sm:$0xff]
    %v281 = vld [vmem:[#allocation3 + $0x2b8] sm:$0xff]
    %v282 = vld [vmem:[#allocation3 + $0x2c0] sm:$0xff]
    %v283 = vld [vmem:[#allocation3 + $0x2c8] sm:$0xff]
    %v284 = vld [vmem:[#allocation3 + $0x2d0] sm:$0xff]
    %v285 = vld [vmem:[#allocation3 + $0x2d8] sm:$0xff]
    %v286 = vld [vmem:[#allocation3 + $0x2e0] sm:$0xff]
    %v287 = vld [vmem:[#allocation3 + $0x2e8] sm:$0xff]
    %v288 = vld [vmem:[#allocation3 + $0x2f0] sm:$0xff]
    %v289 = vld [vmem:[#allocation3 + $0x2f8] sm:$0xff]
    %v290 = vld [vmem:[#allocation3 + $0x300] sm:$0xff]
    %v291 = vld [vmem:[#allocation3 + $0x308] sm:$0xff]
    %v292 = vld [vmem:[#allocation3 + $0x310] sm:$0xff]
    %v293 = vld [vmem:[#allocation3 + $0x318] sm:$0xff]
    %v294 = vld [vmem:[#allocation3 + $0x320] sm:$0xff]
    %v295 = vld [vmem:[#allocation3 + $0x328] sm:$0xff]
    %v296 = vld [vmem:[#allocation3 + $0x330] sm:$0xff]
    %v297 = vld [vmem:[#allocation3 + $0x338] sm:$0xff]
    %v298 = vld [vmem:[#allocation3 + $0x340] sm:$0xff]
    %v299 = vld [vmem:[#allocation3 + $0x348] sm:$0xff]
    %v300 = vld [vmem:[#allocation3 + $0x350] sm:$0xff]
    %v301 = vld [vmem:[#allocation3 + $0x358] sm:$0xff]
    %v302 = vld [vmem:[#allocation3 + $0x360] sm:$0xff]
    %v303 = vld [vmem:[#allocation3 + $0x368] sm:$0xff]
    %v304 = vld [vmem:[#allocation3 + $0x370] sm:$0xff]
    %v305 = vld [vmem:[#allocation3 + $0x378] sm:$0xff]
    %v306 = vld [vmem:[#allocation3 + $0x380] sm:$0xff]
    %v307 = vld [vmem:[#allocation3 + $0x388] sm:$0xff]
    %v308 = vld [vmem:[#allocation3 + $0x390] sm:$0xff]
    %v309 = vld [vmem:[#allocation3 + $0x398] sm:$0xff]
    %v310 = vld [vmem:[#allocation3 + $0x3a0] sm:$0xff]
    %v311 = vld [vmem:[#allocation3 + $0x3a8] sm:$0xff]
    %v312 = vld [vmem:[#allocation3 + $0x3b0] sm:$0xff]
    %v313 = vld [vmem:[#allocation3 + $0x3b8] sm:$0xff]
    %v314 = vld [vmem:[#allocation3 + $0x3c0] sm:$0xff]
    %v315 = vld [vmem:[#allocation3 + $0x3c8] sm:$0xff]
    %v316 = vld [vmem:[#allocation3 + $0x3d0] sm:$0xff]
    %v317 = vld [vmem:[#allocation3 + $0x3d8] sm:$0xff]
    %v318 = vld [vmem:[#allocation3 + $0x3e0] sm:$0xff]
    %v319 = vld [vmem:[#allocation3 + $0x3e8] sm:$0xff]
    %v320 = vld [vmem:[#allocation3 + $0x3f0] sm:$0xff]
    %v321 = vld [vmem:[#allocation3 + $0x3f8] sm:$0xff]
    %v322 = vld [vmem:[#allocation6] sm:$0xf]
    %v323 = vld [vmem:[#allocation6 + $0x4] sm:$0xf]
    %v324 = vld [vmem:[#allocation6 + $0x8] sm:$0xf]
    %v325 = vld [vmem:[#allocation6 + $0xc] sm:$0xf]
    %v326 = vld [vmem:[#allocation6 + $0x10] sm:$0xf]
    %v327 = vld [vmem:[#allocation6 + $0x14] sm:$0xf]
    %v328 = vld [vmem:[#allocation6 + $0x18] sm:$0xf]
    %v329 = vld [vmem:[#allocation6 + $0x1c] sm:$0xf]
    %v330 = vld [vmem:[#allocation6 + $0x20] sm:$0xf]
    %v331 = vld [vmem:[#allocation6 + $0x24] sm:$0xf]
    %v332 = vld [vmem:[#allocation6 + $0x28] sm:$0xf]
    %v333 = vld [vmem:[#allocation6 + $0x2c] sm:$0xf]
    %v334 = vld [vmem:[#allocation6 + $0x30] sm:$0xf]
    %v335 = vld [vmem:[#allocation6 + $0x34] sm:$0xf]
    %v336 = vld [vmem:[#allocation6 + $0x38] sm:$0xf]
    %v337 = vld [vmem:[#allocation6 + $0x3c] sm:$0xf]
    %v338 = vld [vmem:[#allocation6 + $0x40] sm:$0xf]
    %v339 = vld [vmem:[#allocation6 + $0x44] sm:$0xf]
    %v340 = vld [vmem:[#allocation6 + $0x48] sm:$0xf]
    %v341 = vld [vmem:[#allocation6 + $0x4c] sm:$0xf]
    %v342 = vld [vmem:[#allocation6 + $0x50] sm:$0xf]
    %v343 = vld [vmem:[#allocation6 + $0x54] sm:$0xf]
    %v344 = vld [vmem:[#allocation6 + $0x58] sm:$0xf]
    %v345 = vld [vmem:[#allocation6 + $0x5c] sm:$0xf]
    %v346 = vld [vmem:[#allocation6 + $0x60] sm:$0xf]
    %v347 = vld [vmem:[#allocation6 + $0x64] sm:$0xf]
    %v348 = vld [vmem:[#allocation6 + $0x68] sm:$0xf]
    %v349 = vld [vmem:[#allocation6 + $0x6c] sm:$0xf]
    %v350 = vld [vmem:[#allocation6 + $0x70] sm:$0xf]
    %v351 = vld [vmem:[#allocation6 + $0x74] sm:$0xf]
    %v352 = vld [vmem:[#allocation6 + $0x78] sm:$0xf]
    %v353 = vld [vmem:[#allocation6 + $0x7c] sm:$0xf]
    %v354 = vld [vmem:[#allocation6 + $0x80] sm:$0xf]
    %v355 = vld [vmem:[#allocation6 + $0x84] sm:$0xf]
    %v356 = vld [vmem:[#allocation6 + $0x88] sm:$0xf]
    %v357 = vld [vmem:[#allocation6 + $0x8c] sm:$0xf]
    %v358 = vld [vmem:[#allocation6 + $0x90] sm:$0xf]
    %v359 = vld [vmem:[#allocation6 + $0x94] sm:$0xf]
    %v360 = vld [vmem:[#allocation6 + $0x98] sm:$0xf]
    %v361 = vld [vmem:[#allocation6 + $0x9c] sm:$0xf]
    %v362 = vld [vmem:[#allocation6 + $0xa0] sm:$0xf]
    %v363 = vld [vmem:[#allocation6 + $0xa4] sm:$0xf]
    %v364 = vld [vmem:[#allocation6 + $0xa8] sm:$0xf]
    %v365 = vld [vmem:[#allocation6 + $0xac] sm:$0xf]
    %v366 = vld [vmem:[#allocation6 + $0xb0] sm:$0xf]
    %v367 = vld [vmem:[#allocation6 + $0xb4] sm:$0xf]
    %v368 = vld [vmem:[#allocation6 + $0xb8] sm:$0xf]
    %v369 = vld [vmem:[#allocation6 + $0xbc] sm:$0xf]
    %v370 = vld [vmem:[#allocation6 + $0xc0] sm:$0xf]
    %v371 = vld [vmem:[#allocation6 + $0xc4] sm:$0xf]
    %v372 = vld [vmem:[#allocation6 + $0xc8] sm:$0xf]
    %v373 = vld [vmem:[#allocation6 + $0xcc] sm:$0xf]
    %v374 = vld [vmem:[#allocation6 + $0xd0] sm:$0xf]
    %v375 = vld [vmem:[#allocation6 + $0xd4] sm:$0xf]
    %v376 = vld [vmem:[#allocation6 + $0xd8] sm:$0xf]
    %v377 = vld [vmem:[#allocation6 + $0xdc] sm:$0xf]
    %v378 = vld [vmem:[#allocation6 + $0xe0] sm:$0xf]
    %v379 = vld [vmem:[#allocation6 + $0xe4] sm:$0xf]
    %v380 = vld [vmem:[#allocation6 + $0xe8] sm:$0xf]
    %v381 = vld [vmem:[#allocation6 + $0xec] sm:$0xf]
    %v382 = vld [vmem:[#allocation6 + $0xf0] sm:$0xf]
    %v383 = vld [vmem:[#allocation6 + $0xf4] sm:$0xf]
    %v384 = vld [vmem:[#allocation6 + $0xf8] sm:$0xf]
    %v385 = vld [vmem:[#allocation6 + $0xfc] sm:$0xf]
    %v514 = vunpack.c.l.b16 %v194
    %v515 = vunpack.c.h.b16 %v194
    %v516 = vunpack.c.l.b16 %v195
    %v517 = vunpack.c.h.b16 %v195
    %v518 = vunpack.c.l.b16 %v196
    %v519 = vunpack.c.h.b16 %v196
    %v520 = vunpack.c.l.b16 %v197
    %v521 = vunpack.c.h.b16 %v197
    %v522 = vunpack.c.l.b16 %v198
    %v523 = vunpack.c.h.b16 %v198
    %v524 = vunpack.c.l.b16 %v199
    %v525 = vunpack.c.h.b16 %v199
    %v526 = vunpack.c.l.b16 %v200
    %v527 = vunpack.c.h.b16 %v200
    %v528 = vunpack.c.l.b16 %v201
    %v529 = vunpack.c.h.b16 %v201
    %v530 = vunpack.c.l.b16 %v202
    %v531 = vunpack.c.h.b16 %v202
    %v532 = vunpack.c.l.b16 %v203
    %v533 = vunpack.c.h.b16 %v203
    %v534 = vunpack.c.l.b16 %v204
    %v535 = vunpack.c.h.b16 %v204
    %v536 = vunpack.c.l.b16 %v205
    %v537 = vunpack.c.h.b16 %v205
    %v538 = vunpack.c.l.b16 %v206
    %v539 = vunpack.c.h.b16 %v206
    %v540 = vunpack.c.l.b16 %v207
    %v541 = vunpack.c.h.b16 %v207
    %v542 = vunpack.c.l.b16 %v208
    %v543 = vunpack.c.h.b16 %v208
    %v544 = vunpack.c.l.b16 %v209
    %v545 = vunpack.c.h.b16 %v209
    %v546 = vunpack.c.l.b16 %v210
    %v547 = vunpack.c.h.b16 %v210
    %v548 = vunpack.c.l.b16 %v211
    %v549 = vunpack.c.h.b16 %v211
    %v550 = vunpack.c.l.b16 %v212
    %v551 = vunpack.c.h.b16 %v212
    %v552 = vunpack.c.l.b16 %v213
    %v553 = vunpack.c.h.b16 %v213
    %v554 = vunpack.c.l.b16 %v214
    %v555 = vunpack.c.h.b16 %v214
    %v556 = vunpack.c.l.b16 %v215
    %v557 = vunpack.c.h.b16 %v215
    %v558 = vunpack.c.l.b16 %v216
    %v559 = vunpack.c.h.b16 %v216
    %v560 = vunpack.c.l.b16 %v217
    %v561 = vunpack.c.h.b16 %v217
    %v562 = vunpack.c.l.b16 %v218
    %v563 = vunpack.c.h.b16 %v218
    %v564 = vunpack.c.l.b16 %v219
    %v565 = vunpack.c.h.b16 %v219
    %v566 = vunpack.c.l.b16 %v220
    %v567 = vunpack.c.h.b16 %v220
    %v568 = vunpack.c.l.b16 %v221
    %v569 = vunpack.c.h.b16 %v221
    %v570 = vunpack.c.l.b16 %v222
    %v571 = vunpack.c.h.b16 %v222
    %v572 = vunpack.c.l.b16 %v223
    %v573 = vunpack.c.h.b16 %v223
    %v574 = vunpack.c.l.b16 %v224
    %v575 = vunpack.c.h.b16 %v224
    %v576 = vunpack.c.l.b16 %v225
    %v577 = vunpack.c.h.b16 %v225
    %v578 = vunpack.c.l.b16 %v226
    %v579 = vunpack.c.h.b16 %v226
    %v580 = vunpack.c.l.b16 %v227
    %v581 = vunpack.c.h.b16 %v227
    %v582 = vunpack.c.l.b16 %v228
    %v583 = vunpack.c.h.b16 %v228
    %v584 = vunpack.c.l.b16 %v229
    %v585 = vunpack.c.h.b16 %v229
    %v586 = vunpack.c.l.b16 %v230
    %v587 = vunpack.c.h.b16 %v230
    %v588 = vunpack.c.l.b16 %v231
    %v589 = vunpack.c.h.b16 %v231
    %v590 = vunpack.c.l.b16 %v232
    %v591 = vunpack.c.h.b16 %v232
    %v592 = vunpack.c.l.b16 %v233
    %v593 = vunpack.c.h.b16 %v233
    %v594 = vunpack.c.l.b16 %v234
    %v595 = vunpack.c.h.b16 %v234
    %v596 = vunpack.c.l.b16 %v235
    %v597 = vunpack.c.h.b16 %v235
    %v598 = vunpack.c.l.b16 %v236
    %v599 = vunpack.c.h.b16 %v236
    %v600 = vunpack.c.l.b16 %v237
    %v601 = vunpack.c.h.b16 %v237
    %v602 = vunpack.c.l.b16 %v238
    %v603 = vunpack.c.h.b16 %v238
    %v604 = vunpack.c.l.b16 %v239
    %v605 = vunpack.c.h.b16 %v239
    %v606 = vunpack.c.l.b16 %v240
    %v607 = vunpack.c.h.b16 %v240
    %v608 = vunpack.c.l.b16 %v241
    %v609 = vunpack.c.h.b16 %v241
    %v610 = vunpack.c.l.b16 %v242
    %v611 = vunpack.c.h.b16 %v242
    %v612 = vunpack.c.l.b16 %v243
    %v613 = vunpack.c.h.b16 %v243
    %v614 = vunpack.c.l.b16 %v244
    %v615 = vunpack.c.h.b16 %v244
    %v616 = vunpack.c.l.b16 %v245
    %v617 = vunpack.c.h.b16 %v245
    %v618 = vunpack.c.l.b16 %v246
    %v619 = vunpack.c.h.b16 %v246
    %v620 = vunpack.c.l.b16 %v247
    %v621 = vunpack.c.h.b16 %v247
    %v622 = vunpack.c.l.b16 %v248
    %v623 = vunpack.c.h.b16 %v248
    %v624 = vunpack.c.l.b16 %v249
    %v625 = vunpack.c.h.b16 %v249
    %v626 = vunpack.c.l.b16 %v250
    %v627 = vunpack.c.h.b16 %v250
    %v628 = vunpack.c.l.b16 %v251
    %v629 = vunpack.c.h.b16 %v251
    %v630 = vunpack.c.l.b16 %v252
    %v631 = vunpack.c.h.b16 %v252
    %v632 = vunpack.c.l.b16 %v253
    %v633 = vunpack.c.h.b16 %v253
    %v634 = vunpack.c.l.b16 %v254
    %v635 = vunpack.c.h.b16 %v254
    %v636 = vunpack.c.l.b16 %v255
    %v637 = vunpack.c.h.b16 %v255
    %v638 = vunpack.c.l.b16 %v256
    %v639 = vunpack.c.h.b16 %v256
    %v640 = vunpack.c.l.b16 %v257
    %v641 = vunpack.c.h.b16 %v257
    %v642 = vunpack.c.l.b16 %v258
    %v643 = vunpack.c.h.b16 %v258
    %v644 = vunpack.c.l.b16 %v259
    %v645 = vunpack.c.h.b16 %v259
    %v646 = vunpack.c.l.b16 %v260
    %v647 = vunpack.c.h.b16 %v260
    %v648 = vunpack.c.l.b16 %v261
    %v649 = vunpack.c.h.b16 %v261
    %v650 = vunpack.c.l.b16 %v262
    %v651 = vunpack.c.h.b16 %v262
    %v652 = vunpack.c.l.b16 %v263
    %v653 = vunpack.c.h.b16 %v263
    %v654 = vunpack.c.l.b16 %v264
    %v655 = vunpack.c.h.b16 %v264
    %v656 = vunpack.c.l.b16 %v265
    %v657 = vunpack.c.h.b16 %v265
    %v658 = vunpack.c.l.b16 %v266
    %v659 = vunpack.c.h.b16 %v266
    %v660 = vunpack.c.l.b16 %v267
    %v661 = vunpack.c.h.b16 %v267
    %v662 = vunpack.c.l.b16 %v268
    %v663 = vunpack.c.h.b16 %v268
    %v664 = vunpack.c.l.b16 %v269
    %v665 = vunpack.c.h.b16 %v269
    %v666 = vunpack.c.l.b16 %v270
    %v667 = vunpack.c.h.b16 %v270
    %v668 = vunpack.c.l.b16 %v271
    %v669 = vunpack.c.h.b16 %v271
    %v670 = vunpack.c.l.b16 %v272
    %v671 = vunpack.c.h.b16 %v272
    %v672 = vunpack.c.l.b16 %v273
    %v673 = vunpack.c.h.b16 %v273
    %v674 = vunpack.c.l.b16 %v274
    %v675 = vunpack.c.h.b16 %v274
    %v676 = vunpack.c.l.b16 %v275
    %v677 = vunpack.c.h.b16 %v275
    %v678 = vunpack.c.l.b16 %v276
    %v679 = vunpack.c.h.b16 %v276
    %v680 = vunpack.c.l.b16 %v277
    %v681 = vunpack.c.h.b16 %v277
    %v682 = vunpack.c.l.b16 %v278
    %v683 = vunpack.c.h.b16 %v278
    %v684 = vunpack.c.l.b16 %v279
    %v685 = vunpack.c.h.b16 %v279
    %v686 = vunpack.c.l.b16 %v280
    %v687 = vunpack.c.h.b16 %v280
    %v688 = vunpack.c.l.b16 %v281
    %v689 = vunpack.c.h.b16 %v281
    %v690 = vunpack.c.l.b16 %v282
    %v691 = vunpack.c.h.b16 %v282
    %v692 = vunpack.c.l.b16 %v283
    %v693 = vunpack.c.h.b16 %v283
    %v694 = vunpack.c.l.b16 %v284
    %v695 = vunpack.c.h.b16 %v284
    %v696 = vunpack.c.l.b16 %v285
    %v697 = vunpack.c.h.b16 %v285
    %v698 = vunpack.c.l.b16 %v286
    %v699 = vunpack.c.h.b16 %v286
    %v700 = vunpack.c.l.b16 %v287
    %v701 = vunpack.c.h.b16 %v287
    %v702 = vunpack.c.l.b16 %v288
    %v703 = vunpack.c.h.b16 %v288
    %v704 = vunpack.c.l.b16 %v289
    %v705 = vunpack.c.h.b16 %v289
    %v706 = vunpack.c.l.b16 %v290
    %v707 = vunpack.c.h.b16 %v290
    %v708 = vunpack.c.l.b16 %v291
    %v709 = vunpack.c.h.b16 %v291
    %v710 = vunpack.c.l.b16 %v292
    %v711 = vunpack.c.h.b16 %v292
    %v712 = vunpack.c.l.b16 %v293
    %v713 = vunpack.c.h.b16 %v293
    %v714 = vunpack.c.l.b16 %v294
    %v715 = vunpack.c.h.b16 %v294
    %v716 = vunpack.c.l.b16 %v295
    %v717 = vunpack.c.h.b16 %v295
    %v718 = vunpack.c.l.b16 %v296
    %v719 = vunpack.c.h.b16 %v296
    %v720 = vunpack.c.l.b16 %v297
    %v721 = vunpack.c.h.b16 %v297
    %v722 = vunpack.c.l.b16 %v298
    %v723 = vunpack.c.h.b16 %v298
    %v724 = vunpack.c.l.b16 %v299
    %v725 = vunpack.c.h.b16 %v299
    %v726 = vunpack.c.l.b16 %v300
    %v727 = vunpack.c.h.b16 %v300
    %v728 = vunpack.c.l.b16 %v301
    %v729 = vunpack.c.h.b16 %v301
    %v730 = vunpack.c.l.b16 %v302
    %v731 = vunpack.c.h.b16 %v302
    %v732 = vunpack.c.l.b16 %v303
    %v733 = vunpack.c.h.b16 %v303
    %v734 = vunpack.c.l.b16 %v304
    %v735 = vunpack.c.h.b16 %v304
    %v736 = vunpack.c.l.b16 %v305
    %v737 = vunpack.c.h.b16 %v305
    %v738 = vunpack.c.l.b16 %v306
    %v739 = vunpack.c.h.b16 %v306
    %v740 = vunpack.c.l.b16 %v307
    %v741 = vunpack.c.h.b16 %v307
    %v742 = vunpack.c.l.b16 %v308
    %v743 = vunpack.c.h.b16 %v308
    %v744 = vunpack.c.l.b16 %v309
    %v745 = vunpack.c.h.b16 %v309
    %v746 = vunpack.c.l.b16 %v310
    %v747 = vunpack.c.h.b16 %v310
    %v748 = vunpack.c.l.b16 %v311
    %v749 = vunpack.c.h.b16 %v311
    %v750 = vunpack.c.l.b16 %v312
    %v751 = vunpack.c.h.b16 %v312
    %v752 = vunpack.c.l.b16 %v313
    %v753 = vunpack.c.h.b16 %v313
    %v754 = vunpack.c.l.b16 %v314
    %v755 = vunpack.c.h.b16 %v314
    %v756 = vunpack.c.l.b16 %v315
    %v757 = vunpack.c.h.b16 %v315
    %v758 = vunpack.c.l.b16 %v316
    %v759 = vunpack.c.h.b16 %v316
    %v760 = vunpack.c.l.b16 %v317
    %v761 = vunpack.c.h.b16 %v317
    %v762 = vunpack.c.l.b16 %v318
    %v763 = vunpack.c.h.b16 %v318
    %v764 = vunpack.c.l.b16 %v319
    %v765 = vunpack.c.h.b16 %v319
    %v766 = vunpack.c.l.b16 %v320
    %v767 = vunpack.c.h.b16 %v320
    %v768 = vunpack.c.l.b16 %v321
    %v769 = vunpack.c.h.b16 %v321
    %v770 = vpack.c.b16 %v518, %v514
    %v771 = vpack.c.b16 %v519, %v515
    %v772 = vpack.c.b16 %v520, %v516
    %v773 = vpack.c.b16 %v521, %v517
    %v774 = vpack.c.b16 %v526, %v522
    %v775 = vpack.c.b16 %v527, %v523
    %v776 = vpack.c.b16 %v528, %v524
    %v777 = vpack.c.b16 %v529, %v525
    %v778 = vpack.c.b16 %v534, %v530
    %v779 = vpack.c.b16 %v535, %v531
    %v780 = vpack.c.b16 %v536, %v532
    %v781 = vpack.c.b16 %v537, %v533
    %v782 = vpack.c.b16 %v542, %v538
    %v783 = vpack.c.b16 %v543, %v539
    %v784 = vpack.c.b16 %v544, %v540
    %v785 = vpack.c.b16 %v545, %v541
    %v786 = vpack.c.b16 %v550, %v546
    %v787 = vpack.c.b16 %v551, %v547
    %v788 = vpack.c.b16 %v552, %v548
    %v789 = vpack.c.b16 %v553, %v549
    %v790 = vpack.c.b16 %v558, %v554
    %v791 = vpack.c.b16 %v559, %v555
    %v792 = vpack.c.b16 %v560, %v556
    %v793 = vpack.c.b16 %v561, %v557
    %v794 = vpack.c.b16 %v566, %v562
    %v795 = vpack.c.b16 %v567, %v563
    %v796 = vpack.c.b16 %v568, %v564
    %v797 = vpack.c.b16 %v569, %v565
    %v798 = vpack.c.b16 %v574, %v570
    %v799 = vpack.c.b16 %v575, %v571
    %v800 = vpack.c.b16 %v576, %v572
    %v801 = vpack.c.b16 %v577, %v573
    %v802 = vpack.c.b16 %v582, %v578
    %v803 = vpack.c.b16 %v583, %v579
    %v804 = vpack.c.b16 %v584, %v580
    %v805 = vpack.c.b16 %v585, %v581
    %v806 = vpack.c.b16 %v590, %v586
    %v807 = vpack.c.b16 %v591, %v587
    %v808 = vpack.c.b16 %v592, %v588
    %v809 = vpack.c.b16 %v593, %v589
    %v810 = vpack.c.b16 %v598, %v594
    %v811 = vpack.c.b16 %v599, %v595
    %v812 = vpack.c.b16 %v600, %v596
    %v813 = vpack.c.b16 %v601, %v597
    %v814 = vpack.c.b16 %v606, %v602
    %v815 = vpack.c.b16 %v607, %v603
    %v816 = vpack.c.b16 %v608, %v604
    %v817 = vpack.c.b16 %v609, %v605
    %v818 = vpack.c.b16 %v614, %v610
    %v819 = vpack.c.b16 %v615, %v611
    %v820 = vpack.c.b16 %v616, %v612
    %v821 = vpack.c.b16 %v617, %v613
    %v822 = vpack.c.b16 %v622, %v618
    %v823 = vpack.c.b16 %v623, %v619
    %v824 = vpack.c.b16 %v624, %v620
    %v825 = vpack.c.b16 %v625, %v621
    %v826 = vpack.c.b16 %v630, %v626
    %v827 = vpack.c.b16 %v631, %v627
    %v828 = vpack.c.b16 %v632, %v628
    %v829 = vpack.c.b16 %v633, %v629
    %v830 = vpack.c.b16 %v638, %v634
    %v831 = vpack.c.b16 %v639, %v635
    %v832 = vpack.c.b16 %v640, %v636
    %v833 = vpack.c.b16 %v641, %v637
    %v834 = vpack.c.b16 %v646, %v642
    %v835 = vpack.c.b16 %v647, %v643
    %v836 = vpack.c.b16 %v648, %v644
    %v837 = vpack.c.b16 %v649, %v645
    %v838 = vpack.c.b16 %v654, %v650
    %v839 = vpack.c.b16 %v655, %v651
    %v840 = vpack.c.b16 %v656, %v652
    %v841 = vpack.c.b16 %v657, %v653
    %v842 = vpack.c.b16 %v662, %v658
    %v843 = vpack.c.b16 %v663, %v659
    %v844 = vpack.c.b16 %v664, %v660
    %v845 = vpack.c.b16 %v665, %v661
    %v846 = vpack.c.b16 %v670, %v666
    %v847 = vpack.c.b16 %v671, %v667
    %v848 = vpack.c.b16 %v672, %v668
    %v849 = vpack.c.b16 %v673, %v669
    %v850 = vpack.c.b16 %v678, %v674
    %v851 = vpack.c.b16 %v679, %v675
    %v852 = vpack.c.b16 %v680, %v676
    %v853 = vpack.c.b16 %v681, %v677
    %v854 = vpack.c.b16 %v686, %v682
    %v855 = vpack.c.b16 %v687, %v683
    %v856 = vpack.c.b16 %v688, %v684
    %v857 = vpack.c.b16 %v689, %v685
    %v858 = vpack.c.b16 %v694, %v690
    %v859 = vpack.c.b16 %v695, %v691
    %v860 = vpack.c.b16 %v696, %v692
    %v861 = vpack.c.b16 %v697, %v693
    %v862 = vpack.c.b16 %v702, %v698
    %v863 = vpack.c.b16 %v703, %v699
    %v864 = vpack.c.b16 %v704, %v700
    %v865 = vpack.c.b16 %v705, %v701
    %v866 = vpack.c.b16 %v710, %v706
    %v867 = vpack.c.b16 %v711, %v707
    %v868 = vpack.c.b16 %v712, %v708
    %v869 = vpack.c.b16 %v713, %v709
    %v870 = vpack.c.b16 %v718, %v714
    %v871 = vpack.c.b16 %v719, %v715
    %v872 = vpack.c.b16 %v720, %v716
    %v873 = vpack.c.b16 %v721, %v717
    %v874 = vpack.c.b16 %v726, %v722
    %v875 = vpack.c.b16 %v727, %v723
    %v876 = vpack.c.b16 %v728, %v724
    %v877 = vpack.c.b16 %v729, %v725
    %v878 = vpack.c.b16 %v734, %v730
    %v879 = vpack.c.b16 %v735, %v731
    %v880 = vpack.c.b16 %v736, %v732
    %v881 = vpack.c.b16 %v737, %v733
    %v882 = vpack.c.b16 %v742, %v738
    %v883 = vpack.c.b16 %v743, %v739
    %v884 = vpack.c.b16 %v744, %v740
    %v885 = vpack.c.b16 %v745, %v741
    %v886 = vpack.c.b16 %v750, %v746
    %v887 = vpack.c.b16 %v751, %v747
    %v888 = vpack.c.b16 %v752, %v748
    %v889 = vpack.c.b16 %v753, %v749
    %v890 = vpack.c.b16 %v758, %v754
    %v891 = vpack.c.b16 %v759, %v755
    %v892 = vpack.c.b16 %v760, %v756
    %v893 = vpack.c.b16 %v761, %v757
    %v894 = vpack.c.b16 %v766, %v762
    %v895 = vpack.c.b16 %v767, %v763
    %v896 = vpack.c.b16 %v768, %v764
    %v897 = vpack.c.b16 %v769, %v765
    %v1090 = vunpack.c.l.b16 %v322
    %v1091 = vunpack.c.l.b16 %v323
    %v1092 = vunpack.c.l.b16 %v324
    %v1093 = vunpack.c.l.b16 %v325
    %v1094 = vunpack.c.l.b16 %v326
    %v1095 = vunpack.c.l.b16 %v327
    %v1096 = vunpack.c.l.b16 %v328
    %v1097 = vunpack.c.l.b16 %v329
    %v1098 = vunpack.c.l.b16 %v330
    %v1099 = vunpack.c.l.b16 %v331
    %v1100 = vunpack.c.l.b16 %v332
    %v1101 = vunpack.c.l.b16 %v333
    %v1102 = vunpack.c.l.b16 %v334
    %v1103 = vunpack.c.l.b16 %v335
    %v1104 = vunpack.c.l.b16 %v336
    %v1105 = vunpack.c.l.b16 %v337
    %v1106 = vunpack.c.l.b16 %v338
    %v1107 = vunpack.c.l.b16 %v339
    %v1108 = vunpack.c.l.b16 %v340
    %v1109 = vunpack.c.l.b16 %v341
    %v1110 = vunpack.c.l.b16 %v342
    %v1111 = vunpack.c.l.b16 %v343
    %v1112 = vunpack.c.l.b16 %v344
    %v1113 = vunpack.c.l.b16 %v345
    %v1114 = vunpack.c.l.b16 %v346
    %v1115 = vunpack.c.l.b16 %v347
    %v1116 = vunpack.c.l.b16 %v348
    %v1117 = vunpack.c.l.b16 %v349
    %v1118 = vunpack.c.l.b16 %v350
    %v1119 = vunpack.c.l.b16 %v351
    %v1120 = vunpack.c.l.b16 %v352
    %v1121 = vunpack.c.l.b16 %v353
    %v1122 = vunpack.c.l.b16 %v354
    %v1123 = vunpack.c.l.b16 %v355
    %v1124 = vunpack.c.l.b16 %v356
    %v1125 = vunpack.c.l.b16 %v357
    %v1126 = vunpack.c.l.b16 %v358
    %v1127 = vunpack.c.l.b16 %v359
    %v1128 = vunpack.c.l.b16 %v360
    %v1129 = vunpack.c.l.b16 %v361
    %v1130 = vunpack.c.l.b16 %v362
    %v1131 = vunpack.c.l.b16 %v363
    %v1132 = vunpack.c.l.b16 %v364
    %v1133 = vunpack.c.l.b16 %v365
    %v1134 = vunpack.c.l.b16 %v366
    %v1135 = vunpack.c.l.b16 %v367
    %v1136 = vunpack.c.l.b16 %v368
    %v1137 = vunpack.c.l.b16 %v369
    %v1138 = vunpack.c.l.b16 %v370
    %v1139 = vunpack.c.l.b16 %v371
    %v1140 = vunpack.c.l.b16 %v372
    %v1141 = vunpack.c.l.b16 %v373
    %v1142 = vunpack.c.l.b16 %v374
    %v1143 = vunpack.c.l.b16 %v375
    %v1144 = vunpack.c.l.b16 %v376
    %v1145 = vunpack.c.l.b16 %v377
    %v1146 = vunpack.c.l.b16 %v378
    %v1147 = vunpack.c.l.b16 %v379
    %v1148 = vunpack.c.l.b16 %v380
    %v1149 = vunpack.c.l.b16 %v381
    %v1150 = vunpack.c.l.b16 %v382
    %v1151 = vunpack.c.l.b16 %v383
    %v1152 = vunpack.c.l.b16 %v384
    %v1153 = vunpack.c.l.b16 %v385
    %v1154 = vpack.c.b16 %v1091, %v1090
    %v1155 = vpack.c.b16 %v1093, %v1092
    %v1156 = vpack.c.b16 %v1095, %v1094
    %v1157 = vpack.c.b16 %v1097, %v1096
    %v1158 = vpack.c.b16 %v1099, %v1098
    %v1159 = vpack.c.b16 %v1101, %v1100
    %v1160 = vpack.c.b16 %v1103, %v1102
    %v1161 = vpack.c.b16 %v1105, %v1104
    %v1162 = vpack.c.b16 %v1107, %v1106
    %v1163 = vpack.c.b16 %v1109, %v1108
    %v1164 = vpack.c.b16 %v1111, %v1110
    %v1165 = vpack.c.b16 %v1113, %v1112
    %v1166 = vpack.c.b16 %v1115, %v1114
    %v1167 = vpack.c.b16 %v1117, %v1116
    %v1168 = vpack.c.b16 %v1119, %v1118
    %v1169 = vpack.c.b16 %v1121, %v1120
    %v1170 = vpack.c.b16 %v1123, %v1122
    %v1171 = vpack.c.b16 %v1125, %v1124
    %v1172 = vpack.c.b16 %v1127, %v1126
    %v1173 = vpack.c.b16 %v1129, %v1128
    %v1174 = vpack.c.b16 %v1131, %v1130
    %v1175 = vpack.c.b16 %v1133, %v1132
    %v1176 = vpack.c.b16 %v1135, %v1134
    %v1177 = vpack.c.b16 %v1137, %v1136
    %v1178 = vpack.c.b16 %v1139, %v1138
    %v1179 = vpack.c.b16 %v1141, %v1140
    %v1180 = vpack.c.b16 %v1143, %v1142
    %v1181 = vpack.c.b16 %v1145, %v1144
    %v1182 = vpack.c.b16 %v1147, %v1146
    %v1183 = vpack.c.b16 %v1149, %v1148
    %v1184 = vpack.c.b16 %v1151, %v1150
    %v1185 = vpack.c.b16 %v1153, %v1152
    %1218 = vmatpush.bf16.msra.mxu0 %v1161
    %1219 = vmatpush.bf16.msra.mxu0 %v1160
    %1220 = vmatpush.bf16.msra.mxu0 %v1159
    %1221 = vmatpush.bf16.msra.mxu0 %v1158
    %1222 = vmatpush.bf16.msra.mxu0 %v1157
    %1223 = vmatpush.bf16.msra.mxu0 %v1156
    %1224 = vmatpush.bf16.msra.mxu0 %v1155
    %1225 = vmatpush.bf16.msra.mxu0 %v1154
    %1226 = vmatmul.bf16.gmra.mxu0 %v770
    %v1227 = vpop.f32.mrf.mxu0
    %v1228 = vadd.f32 0.0, %v1227
    %v1229 = vpop.f32.mrf.mxu0
    %v1230 = vadd.f32 0.0, %v1229
    %1231 = vmatmul.bf16.gmra.mxu0 %v774
    %v1232 = vpop.f32.mrf.mxu0
    %v1233 = vadd.f32 0.0, %v1232
    %v1234 = vpop.f32.mrf.mxu0
    %v1235 = vadd.f32 0.0, %v1234
    %1236 = vmatmul.bf16.gmra.mxu0 %v778
    %v1237 = vpop.f32.mrf.mxu0
    %v1238 = vadd.f32 0.0, %v1237
    %v1239 = vpop.f32.mrf.mxu0
    %v1240 = vadd.f32 0.0, %v1239
    %1241 = vmatmul.bf16.gmra.mxu0 %v782
    %v1242 = vpop.f32.mrf.mxu0
    %v1243 = vadd.f32 0.0, %v1242
    %v1244 = vpop.f32.mrf.mxu0
    %v1245 = vadd.f32 0.0, %v1244
    %1246 = vmatmul.bf16.gmra.mxu0 %v786
    %v1247 = vpop.f32.mrf.mxu0
    %v1248 = vadd.f32 0.0, %v1247
    %v1249 = vpop.f32.mrf.mxu0
    %v1250 = vadd.f32 0.0, %v1249
    %1251 = vmatmul.bf16.gmra.mxu0 %v790
    %v1252 = vpop.f32.mrf.mxu0
    %v1253 = vadd.f32 0.0, %v1252
    %v1254 = vpop.f32.mrf.mxu0
    %v1255 = vadd.f32 0.0, %v1254
    %1256 = vmatmul.bf16.gmra.mxu0 %v794
    %v1257 = vpop.f32.mrf.mxu0
    %v1258 = vadd.f32 0.0, %v1257
    %v1259 = vpop.f32.mrf.mxu0
    %v1260 = vadd.f32 0.0, %v1259
    %1261 = vmatmul.bf16.gmra.mxu0 %v798
    %v1262 = vpop.f32.mrf.mxu0
    %v1263 = vadd.f32 0.0, %v1262
    %v1264 = vpop.f32.mrf.mxu0
    %v1265 = vadd.f32 0.0, %v1264
    %1266 = vmatmul.bf16.gmra.mxu0 %v802
    %v1267 = vpop.f32.mrf.mxu0
    %v1268 = vadd.f32 0.0, %v1267
    %v1269 = vpop.f32.mrf.mxu0
    %v1270 = vadd.f32 0.0, %v1269
    %1271 = vmatmul.bf16.gmra.mxu0 %v806
    %v1272 = vpop.f32.mrf.mxu0
    %v1273 = vadd.f32 0.0, %v1272
    %v1274 = vpop.f32.mrf.mxu0
    %v1275 = vadd.f32 0.0, %v1274
    %1276 = vmatmul.bf16.gmra.mxu0 %v810
    %v1277 = vpop.f32.mrf.mxu0
    %v1278 = vadd.f32 0.0, %v1277
    %v1279 = vpop.f32.mrf.mxu0
    %v1280 = vadd.f32 0.0, %v1279
    %1281 = vmatmul.bf16.gmra.mxu0 %v814
    %v1282 = vpop.f32.mrf.mxu0
    %v1283 = vadd.f32 0.0, %v1282
    %v1284 = vpop.f32.mrf.mxu0
    %v1285 = vadd.f32 0.0, %v1284
    %1286 = vmatmul.bf16.gmra.mxu0 %v818
    %v1287 = vpop.f32.mrf.mxu0
    %v1288 = vadd.f32 0.0, %v1287
    %v1289 = vpop.f32.mrf.mxu0
    %v1290 = vadd.f32 0.0, %v1289
    %1291 = vmatmul.bf16.gmra.mxu0 %v822
    %v1292 = vpop.f32.mrf.mxu0
    %v1293 = vadd.f32 0.0, %v1292
    %v1294 = vpop.f32.mrf.mxu0
    %v1295 = vadd.f32 0.0, %v1294
    %1296 = vmatmul.bf16.gmra.mxu0 %v826
    %v1297 = vpop.f32.mrf.mxu0
    %v1298 = vadd.f32 0.0, %v1297
    %v1299 = vpop.f32.mrf.mxu0
    %v1300 = vadd.f32 0.0, %v1299
    %1301 = vmatmul.bf16.gmra.mxu0 %v830
    %v1302 = vpop.f32.mrf.mxu0
    %v1303 = vadd.f32 0.0, %v1302
    %v1304 = vpop.f32.mrf.mxu0
    %v1305 = vadd.f32 0.0, %v1304
    %1306 = vmatmul.bf16.gmra.mxu0 %v834
    %v1307 = vpop.f32.mrf.mxu0
    %v1308 = vadd.f32 0.0, %v1307
    %v1309 = vpop.f32.mrf.mxu0
    %v1310 = vadd.f32 0.0, %v1309
    %1311 = vmatmul.bf16.gmra.mxu0 %v838
    %v1312 = vpop.f32.mrf.mxu0
    %v1313 = vadd.f32 0.0, %v1312
    %v1314 = vpop.f32.mrf.mxu0
    %v1315 = vadd.f32 0.0, %v1314
    %1316 = vmatmul.bf16.gmra.mxu0 %v842
    %v1317 = vpop.f32.mrf.mxu0
    %v1318 = vadd.f32 0.0, %v1317
    %v1319 = vpop.f32.mrf.mxu0
    %v1320 = vadd.f32 0.0, %v1319
    %1321 = vmatmul.bf16.gmra.mxu0 %v846
    %v1322 = vpop.f32.mrf.mxu0
    %v1323 = vadd.f32 0.0, %v1322
    %v1324 = vpop.f32.mrf.mxu0
    %v1325 = vadd.f32 0.0, %v1324
    %1326 = vmatmul.bf16.gmra.mxu0 %v850
    %v1327 = vpop.f32.mrf.mxu0
    %v1328 = vadd.f32 0.0, %v1327
    %v1329 = vpop.f32.mrf.mxu0
    %v1330 = vadd.f32 0.0, %v1329
    %1331 = vmatmul.bf16.gmra.mxu0 %v854
    %v1332 = vpop.f32.mrf.mxu0
    %v1333 = vadd.f32 0.0, %v1332
    %v1334 = vpop.f32.mrf.mxu0
    %v1335 = vadd.f32 0.0, %v1334
    %1336 = vmatmul.bf16.gmra.mxu0 %v858
    %v1337 = vpop.f32.mrf.mxu0
    %v1338 = vadd.f32 0.0, %v1337
    %v1339 = vpop.f32.mrf.mxu0
    %v1340 = vadd.f32 0.0, %v1339
    %1341 = vmatmul.bf16.gmra.mxu0 %v862
    %v1342 = vpop.f32.mrf.mxu0
    %v1343 = vadd.f32 0.0, %v1342
    %v1344 = vpop.f32.mrf.mxu0
    %v1345 = vadd.f32 0.0, %v1344
    %1346 = vmatmul.bf16.gmra.mxu0 %v866
    %v1347 = vpop.f32.mrf.mxu0
    %v1348 = vadd.f32 0.0, %v1347
    %v1349 = vpop.f32.mrf.mxu0
    %v1350 = vadd.f32 0.0, %v1349
    %1351 = vmatmul.bf16.gmra.mxu0 %v870
    %v1352 = vpop.f32.mrf.mxu0
    %v1353 = vadd.f32 0.0, %v1352
    %v1354 = vpop.f32.mrf.mxu0
    %v1355 = vadd.f32 0.0, %v1354
    %1356 = vmatmul.bf16.gmra.mxu0 %v874
    %v1357 = vpop.f32.mrf.mxu0
    %v1358 = vadd.f32 0.0, %v1357
    %v1359 = vpop.f32.mrf.mxu0
    %v1360 = vadd.f32 0.0, %v1359
    %1361 = vmatmul.bf16.gmra.mxu0 %v878
    %v1362 = vpop.f32.mrf.mxu0
    %v1363 = vadd.f32 0.0, %v1362
    %v1364 = vpop.f32.mrf.mxu0
    %v1365 = vadd.f32 0.0, %v1364
    %1366 = vmatmul.bf16.gmra.mxu0 %v882
    %v1367 = vpop.f32.mrf.mxu0
    %v1368 = vadd.f32 0.0, %v1367
    %v1369 = vpop.f32.mrf.mxu0
    %v1370 = vadd.f32 0.0, %v1369
    %1371 = vmatmul.bf16.gmra.mxu0 %v886
    %v1372 = vpop.f32.mrf.mxu0
    %v1373 = vadd.f32 0.0, %v1372
    %v1374 = vpop.f32.mrf.mxu0
    %v1375 = vadd.f32 0.0, %v1374
    %1376 = vmatmul.bf16.gmra.mxu0 %v890
    %v1377 = vpop.f32.mrf.mxu0
    %v1378 = vadd.f32 0.0, %v1377
    %v1379 = vpop.f32.mrf.mxu0
    %v1380 = vadd.f32 0.0, %v1379
    %1381 = vmatmul.bf16.gmra.mxu0 %v894
    %v1382 = vpop.f32.mrf.mxu0
    %v1383 = vadd.f32 0.0, %v1382
    %v1384 = vpop.f32.mrf.mxu0
    %v1385 = vadd.f32 0.0, %v1384
    %1386 = vdwg.mxu0
    %1387 = vmatpush.bf16.msra.mxu0 %v1169
    %1388 = vmatpush.bf16.msra.mxu0 %v1168
    %1389 = vmatpush.bf16.msra.mxu0 %v1167
    %1390 = vmatpush.bf16.msra.mxu0 %v1166
    %1391 = vmatpush.bf16.msra.mxu0 %v1165
    %1392 = vmatpush.bf16.msra.mxu0 %v1164
    %1393 = vmatpush.bf16.msra.mxu0 %v1163
    %1394 = vmatpush.bf16.msra.mxu0 %v1162
    %1395 = vmatmul.bf16.gmra.mxu0 %v771
    %v1396 = vpop.f32.mrf.mxu0
    %v1397 = vadd.f32 %v1228, %v1396
    %v1398 = vpop.f32.mrf.mxu0
    %v1399 = vadd.f32 %v1230, %v1398
    %1400 = vmatmul.bf16.gmra.mxu0 %v775
    %v1401 = vpop.f32.mrf.mxu0
    %v1402 = vadd.f32 %v1233, %v1401
    %v1403 = vpop.f32.mrf.mxu0
    %v1404 = vadd.f32 %v1235, %v1403
    %1405 = vmatmul.bf16.gmra.mxu0 %v779
    %v1406 = vpop.f32.mrf.mxu0
    %v1407 = vadd.f32 %v1238, %v1406
    %v1408 = vpop.f32.mrf.mxu0
    %v1409 = vadd.f32 %v1240, %v1408
    %1410 = vmatmul.bf16.gmra.mxu0 %v783
    %v1411 = vpop.f32.mrf.mxu0
    %v1412 = vadd.f32 %v1243, %v1411
    %v1413 = vpop.f32.mrf.mxu0
    %v1414 = vadd.f32 %v1245, %v1413
    %1415 = vmatmul.bf16.gmra.mxu0 %v787
    %v1416 = vpop.f32.mrf.mxu0
    %v1417 = vadd.f32 %v1248, %v1416
    %v1418 = vpop.f32.mrf.mxu0
    %v1419 = vadd.f32 %v1250, %v1418
    %1420 = vmatmul.bf16.gmra.mxu0 %v791
    %v1421 = vpop.f32.mrf.mxu0
    %v1422 = vadd.f32 %v1253, %v1421
    %v1423 = vpop.f32.mrf.mxu0
    %v1424 = vadd.f32 %v1255, %v1423
    %1425 = vmatmul.bf16.gmra.mxu0 %v795
    %v1426 = vpop.f32.mrf.mxu0
    %v1427 = vadd.f32 %v1258, %v1426
    %v1428 = vpop.f32.mrf.mxu0
    %v1429 = vadd.f32 %v1260, %v1428
    %1430 = vmatmul.bf16.gmra.mxu0 %v799
    %v1431 = vpop.f32.mrf.mxu0
    %v1432 = vadd.f32 %v1263, %v1431
    %v1433 = vpop.f32.mrf.mxu0
    %v1434 = vadd.f32 %v1265, %v1433
    %1435 = vmatmul.bf16.gmra.mxu0 %v803
    %v1436 = vpop.f32.mrf.mxu0
    %v1437 = vadd.f32 %v1268, %v1436
    %v1438 = vpop.f32.mrf.mxu0
    %v1439 = vadd.f32 %v1270, %v1438
    %1440 = vmatmul.bf16.gmra.mxu0 %v807
    %v1441 = vpop.f32.mrf.mxu0
    %v1442 = vadd.f32 %v1273, %v1441
    %v1443 = vpop.f32.mrf.mxu0
    %v1444 = vadd.f32 %v1275, %v1443
    %1445 = vmatmul.bf16.gmra.mxu0 %v811
    %v1446 = vpop.f32.mrf.mxu0
    %v1447 = vadd.f32 %v1278, %v1446
    %v1448 = vpop.f32.mrf.mxu0
    %v1449 = vadd.f32 %v1280, %v1448
    %1450 = vmatmul.bf16.gmra.mxu0 %v815
    %v1451 = vpop.f32.mrf.mxu0
    %v1452 = vadd.f32 %v1283, %v1451
    %v1453 = vpop.f32.mrf.mxu0
    %v1454 = vadd.f32 %v1285, %v1453
    %1455 = vmatmul.bf16.gmra.mxu0 %v819
    %v1456 = vpop.f32.mrf.mxu0
    %v1457 = vadd.f32 %v1288, %v1456
    %v1458 = vpop.f32.mrf.mxu0
    %v1459 = vadd.f32 %v1290, %v1458
    %1460 = vmatmul.bf16.gmra.mxu0 %v823
    %v1461 = vpop.f32.mrf.mxu0
    %v1462 = vadd.f32 %v1293, %v1461
    %v1463 = vpop.f32.mrf.mxu0
    %v1464 = vadd.f32 %v1295, %v1463
    %1465 = vmatmul.bf16.gmra.mxu0 %v827
    %v1466 = vpop.f32.mrf.mxu0
    %v1467 = vadd.f32 %v1298, %v1466
    %v1468 = vpop.f32.mrf.mxu0
    %v1469 = vadd.f32 %v1300, %v1468
    %1470 = vmatmul.bf16.gmra.mxu0 %v831
    %v1471 = vpop.f32.mrf.mxu0
    %v1472 = vadd.f32 %v1303, %v1471
    %v1473 = vpop.f32.mrf.mxu0
    %v1474 = vadd.f32 %v1305, %v1473
    %1475 = vmatmul.bf16.gmra.mxu0 %v835
    %v1476 = vpop.f32.mrf.mxu0
    %v1477 = vadd.f32 %v1308, %v1476
    %v1478 = vpop.f32.mrf.mxu0
    %v1479 = vadd.f32 %v1310, %v1478
    %1480 = vmatmul.bf16.gmra.mxu0 %v839
    %v1481 = vpop.f32.mrf.mxu0
    %v1482 = vadd.f32 %v1313, %v1481
    %v1483 = vpop.f32.mrf.mxu0
    %v1484 = vadd.f32 %v1315, %v1483
    %1485 = vmatmul.bf16.gmra.mxu0 %v843
    %v1486 = vpop.f32.mrf.mxu0
    %v1487 = vadd.f32 %v1318, %v1486
    %v1488 = vpop.f32.mrf.mxu0
    %v1489 = vadd.f32 %v1320, %v1488
    %1490 = vmatmul.bf16.gmra.mxu0 %v847
    %v1491 = vpop.f32.mrf.mxu0
    %v1492 = vadd.f32 %v1323, %v1491
    %v1493 = vpop.f32.mrf.mxu0
    %v1494 = vadd.f32 %v1325, %v1493
    %1495 = vmatmul.bf16.gmra.mxu0 %v851
    %v1496 = vpop.f32.mrf.mxu0
    %v1497 = vadd.f32 %v1328, %v1496
    %v1498 = vpop.f32.mrf.mxu0
    %v1499 = vadd.f32 %v1330, %v1498
    %1500 = vmatmul.bf16.gmra.mxu0 %v855
    %v1501 = vpop.f32.mrf.mxu0
    %v1502 = vadd.f32 %v1333, %v1501
    %v1503 = vpop.f32.mrf.mxu0
    %v1504 = vadd.f32 %v1335, %v1503
    %1505 = vmatmul.bf16.gmra.mxu0 %v859
    %v1506 = vpop.f32.mrf.mxu0
    %v1507 = vadd.f32 %v1338, %v1506
    %v1508 = vpop.f32.mrf.mxu0
    %v1509 = vadd.f32 %v1340, %v1508
    %1510 = vmatmul.bf16.gmra.mxu0 %v863
    %v1511 = vpop.f32.mrf.mxu0
    %v1512 = vadd.f32 %v1343, %v1511
    %v1513 = vpop.f32.mrf.mxu0
    %v1514 = vadd.f32 %v1345, %v1513
    %1515 = vmatmul.bf16.gmra.mxu0 %v867
    %v1516 = vpop.f32.mrf.mxu0
    %v1517 = vadd.f32 %v1348, %v1516
    %v1518 = vpop.f32.mrf.mxu0
    %v1519 = vadd.f32 %v1350, %v1518
    %1520 = vmatmul.bf16.gmra.mxu0 %v871
    %v1521 = vpop.f32.mrf.mxu0
    %v1522 = vadd.f32 %v1353, %v1521
    %v1523 = vpop.f32.mrf.mxu0
    %v1524 = vadd.f32 %v1355, %v1523
    %1525 = vmatmul.bf16.gmra.mxu0 %v875
    %v1526 = vpop.f32.mrf.mxu0
    %v1527 = vadd.f32 %v1358, %v1526
    %v1528 = vpop.f32.mrf.mxu0
    %v1529 = vadd.f32 %v1360, %v1528
    %1530 = vmatmul.bf16.gmra.mxu0 %v879
    %v1531 = vpop.f32.mrf.mxu0
    %v1532 = vadd.f32 %v1363, %v1531
    %v1533 = vpop.f32.mrf.mxu0
    %v1534 = vadd.f32 %v1365, %v1533
    %1535 = vmatmul.bf16.gmra.mxu0 %v883
    %v1536 = vpop.f32.mrf.mxu0
    %v1537 = vadd.f32 %v1368, %v1536
    %v1538 = vpop.f32.mrf.mxu0
    %v1539 = vadd.f32 %v1370, %v1538
    %1540 = vmatmul.bf16.gmra.mxu0 %v887
    %v1541 = vpop.f32.mrf.mxu0
    %v1542 = vadd.f32 %v1373, %v1541
    %v1543 = vpop.f32.mrf.mxu0
    %v1544 = vadd.f32 %v1375, %v1543
    %1545 = vmatmul.bf16.gmra.mxu0 %v891
    %v1546 = vpop.f32.mrf.mxu0
    %v1547 = vadd.f32 %v1378, %v1546
    %v1548 = vpop.f32.mrf.mxu0
    %v1549 = vadd.f32 %v1380, %v1548
    %1550 = vmatmul.bf16.gmra.mxu0 %v895
    %v1551 = vpop.f32.mrf.mxu0
    %v1552 = vadd.f32 %v1383, %v1551
    %v1553 = vpop.f32.mrf.mxu0
    %v1554 = vadd.f32 %v1385, %v1553
    %1555 = vdwg.mxu0
    %1556 = vmatpush.bf16.msra.mxu0 %v1177
    %1557 = vmatpush.bf16.msra.mxu0 %v1176
    %1558 = vmatpush.bf16.msra.mxu0 %v1175
    %1559 = vmatpush.bf16.msra.mxu0 %v1174
    %1560 = vmatpush.bf16.msra.mxu0 %v1173
    %1561 = vmatpush.bf16.msra.mxu0 %v1172
    %1562 = vmatpush.bf16.msra.mxu0 %v1171
    %1563 = vmatpush.bf16.msra.mxu0 %v1170
    %1564 = vmatmul.bf16.gmra.mxu0 %v772
    %v1565 = vpop.f32.mrf.mxu0
    %v1566 = vadd.f32 %v1397, %v1565
    %v1567 = vpop.f32.mrf.mxu0
    %v1568 = vadd.f32 %v1399, %v1567
    %1569 = vmatmul.bf16.gmra.mxu0 %v776
    %v1570 = vpop.f32.mrf.mxu0
    %v1571 = vadd.f32 %v1402, %v1570
    %v1572 = vpop.f32.mrf.mxu0
    %v1573 = vadd.f32 %v1404, %v1572
    %1574 = vmatmul.bf16.gmra.mxu0 %v780
    %v1575 = vpop.f32.mrf.mxu0
    %v1576 = vadd.f32 %v1407, %v1575
    %v1577 = vpop.f32.mrf.mxu0
    %v1578 = vadd.f32 %v1409, %v1577
    %1579 = vmatmul.bf16.gmra.mxu0 %v784
    %v1580 = vpop.f32.mrf.mxu0
    %v1581 = vadd.f32 %v1412, %v1580
    %v1582 = vpop.f32.mrf.mxu0
    %v1583 = vadd.f32 %v1414, %v1582
    %1584 = vmatmul.bf16.gmra.mxu0 %v788
    %v1585 = vpop.f32.mrf.mxu0
    %v1586 = vadd.f32 %v1417, %v1585
    %v1587 = vpop.f32.mrf.mxu0
    %v1588 = vadd.f32 %v1419, %v1587
    %1589 = vmatmul.bf16.gmra.mxu0 %v792
    %v1590 = vpop.f32.mrf.mxu0
    %v1591 = vadd.f32 %v1422, %v1590
    %v1592 = vpop.f32.mrf.mxu0
    %v1593 = vadd.f32 %v1424, %v1592
    %1594 = vmatmul.bf16.gmra.mxu0 %v796
    %v1595 = vpop.f32.mrf.mxu0
    %v1596 = vadd.f32 %v1427, %v1595
    %v1597 = vpop.f32.mrf.mxu0
    %v1598 = vadd.f32 %v1429, %v1597
    %1599 = vmatmul.bf16.gmra.mxu0 %v800
    %v1600 = vpop.f32.mrf.mxu0
    %v1601 = vadd.f32 %v1432, %v1600
    %v1602 = vpop.f32.mrf.mxu0
    %v1603 = vadd.f32 %v1434, %v1602
    %1604 = vmatmul.bf16.gmra.mxu0 %v804
    %v1605 = vpop.f32.mrf.mxu0
    %v1606 = vadd.f32 %v1437, %v1605
    %v1607 = vpop.f32.mrf.mxu0
    %v1608 = vadd.f32 %v1439, %v1607
    %1609 = vmatmul.bf16.gmra.mxu0 %v808
    %v1610 = vpop.f32.mrf.mxu0
    %v1611 = vadd.f32 %v1442, %v1610
    %v1612 = vpop.f32.mrf.mxu0
    %v1613 = vadd.f32 %v1444, %v1612
    %1614 = vmatmul.bf16.gmra.mxu0 %v812
    %v1615 = vpop.f32.mrf.mxu0
    %v1616 = vadd.f32 %v1447, %v1615
    %v1617 = vpop.f32.mrf.mxu0
    %v1618 = vadd.f32 %v1449, %v1617
    %1619 = vmatmul.bf16.gmra.mxu0 %v816
    %v1620 = vpop.f32.mrf.mxu0
    %v1621 = vadd.f32 %v1452, %v1620
    %v1622 = vpop.f32.mrf.mxu0
    %v1623 = vadd.f32 %v1454, %v1622
    %1624 = vmatmul.bf16.gmra.mxu0 %v820
    %v1625 = vpop.f32.mrf.mxu0
    %v1626 = vadd.f32 %v1457, %v1625
    %v1627 = vpop.f32.mrf.mxu0
    %v1628 = vadd.f32 %v1459, %v1627
    %1629 = vmatmul.bf16.gmra.mxu0 %v824
    %v1630 = vpop.f32.mrf.mxu0
    %v1631 = vadd.f32 %v1462, %v1630
    %v1632 = vpop.f32.mrf.mxu0
    %v1633 = vadd.f32 %v1464, %v1632
    %1634 = vmatmul.bf16.gmra.mxu0 %v828
    %v1635 = vpop.f32.mrf.mxu0
    %v1636 = vadd.f32 %v1467, %v1635
    %v1637 = vpop.f32.mrf.mxu0
    %v1638 = vadd.f32 %v1469, %v1637
    %1639 = vmatmul.bf16.gmra.mxu0 %v832
    %v1640 = vpop.f32.mrf.mxu0
    %v1641 = vadd.f32 %v1472, %v1640
    %v1642 = vpop.f32.mrf.mxu0
    %v1643 = vadd.f32 %v1474, %v1642
    %1644 = vmatmul.bf16.gmra.mxu0 %v836
    %v1645 = vpop.f32.mrf.mxu0
    %v1646 = vadd.f32 %v1477, %v1645
    %v1647 = vpop.f32.mrf.mxu0
    %v1648 = vadd.f32 %v1479, %v1647
    %1649 = vmatmul.bf16.gmra.mxu0 %v840
    %v1650 = vpop.f32.mrf.mxu0
    %v1651 = vadd.f32 %v1482, %v1650
    %v1652 = vpop.f32.mrf.mxu0
    %v1653 = vadd.f32 %v1484, %v1652
    %1654 = vmatmul.bf16.gmra.mxu0 %v844
    %v1655 = vpop.f32.mrf.mxu0
    %v1656 = vadd.f32 %v1487, %v1655
    %v1657 = vpop.f32.mrf.mxu0
    %v1658 = vadd.f32 %v1489, %v1657
    %1659 = vmatmul.bf16.gmra.mxu0 %v848
    %v1660 = vpop.f32.mrf.mxu0
    %v1661 = vadd.f32 %v1492, %v1660
    %v1662 = vpop.f32.mrf.mxu0
    %v1663 = vadd.f32 %v1494, %v1662
    %1664 = vmatmul.bf16.gmra.mxu0 %v852
    %v1665 = vpop.f32.mrf.mxu0
    %v1666 = vadd.f32 %v1497, %v1665
    %v1667 = vpop.f32.mrf.mxu0
    %v1668 = vadd.f32 %v1499, %v1667
    %1669 = vmatmul.bf16.gmra.mxu0 %v856
    %v1670 = vpop.f32.mrf.mxu0
    %v1671 = vadd.f32 %v1502, %v1670
    %v1672 = vpop.f32.mrf.mxu0
    %v1673 = vadd.f32 %v1504, %v1672
    %1674 = vmatmul.bf16.gmra.mxu0 %v860
    %v1675 = vpop.f32.mrf.mxu0
    %v1676 = vadd.f32 %v1507, %v1675
    %v1677 = vpop.f32.mrf.mxu0
    %v1678 = vadd.f32 %v1509, %v1677
    %1679 = vmatmul.bf16.gmra.mxu0 %v864
    %v1680 = vpop.f32.mrf.mxu0
    %v1681 = vadd.f32 %v1512, %v1680
    %v1682 = vpop.f32.mrf.mxu0
    %v1683 = vadd.f32 %v1514, %v1682
    %1684 = vmatmul.bf16.gmra.mxu0 %v868
    %v1685 = vpop.f32.mrf.mxu0
    %v1686 = vadd.f32 %v1517, %v1685
    %v1687 = vpop.f32.mrf.mxu0
    %v1688 = vadd.f32 %v1519, %v1687
    %1689 = vmatmul.bf16.gmra.mxu0 %v872
    %v1690 = vpop.f32.mrf.mxu0
    %v1691 = vadd.f32 %v1522, %v1690
    %v1692 = vpop.f32.mrf.mxu0
    %v1693 = vadd.f32 %v1524, %v1692
    %1694 = vmatmul.bf16.gmra.mxu0 %v876
    %v1695 = vpop.f32.mrf.mxu0
    %v1696 = vadd.f32 %v1527, %v1695
    %v1697 = vpop.f32.mrf.mxu0
    %v1698 = vadd.f32 %v1529, %v1697
    %1699 = vmatmul.bf16.gmra.mxu0 %v880
    %v1700 = vpop.f32.mrf.mxu0
    %v1701 = vadd.f32 %v1532, %v1700
    %v1702 = vpop.f32.mrf.mxu0
    %v1703 = vadd.f32 %v1534, %v1702
    %1704 = vmatmul.bf16.gmra.mxu0 %v884
    %v1705 = vpop.f32.mrf.mxu0
    %v1706 = vadd.f32 %v1537, %v1705
    %v1707 = vpop.f32.mrf.mxu0
    %v1708 = vadd.f32 %v1539, %v1707
    %1709 = vmatmul.bf16.gmra.mxu0 %v888
    %v1710 = vpop.f32.mrf.mxu0
    %v1711 = vadd.f32 %v1542, %v1710
    %v1712 = vpop.f32.mrf.mxu0
    %v1713 = vadd.f32 %v1544, %v1712
    %1714 = vmatmul.bf16.gmra.mxu0 %v892
    %v1715 = vpop.f32.mrf.mxu0
    %v1716 = vadd.f32 %v1547, %v1715
    %v1717 = vpop.f32.mrf.mxu0
    %v1718 = vadd.f32 %v1549, %v1717
    %1719 = vmatmul.bf16.gmra.mxu0 %v896
    %v1720 = vpop.f32.mrf.mxu0
    %v1721 = vadd.f32 %v1552, %v1720
    %v1722 = vpop.f32.mrf.mxu0
    %v1723 = vadd.f32 %v1554, %v1722
    %1724 = vdwg.mxu0
    %1725 = vmatpush.bf16.msra.mxu0 %v1185
    %1726 = vmatpush.bf16.msra.mxu0 %v1184
    %1727 = vmatpush.bf16.msra.mxu0 %v1183
    %1728 = vmatpush.bf16.msra.mxu0 %v1182
    %1729 = vmatpush.bf16.msra.mxu0 %v1181
    %1730 = vmatpush.bf16.msra.mxu0 %v1180
    %1731 = vmatpush.bf16.msra.mxu0 %v1179
    %1732 = vmatpush.bf16.msra.mxu0 %v1178
    %1733 = vmatmul.bf16.gmra.mxu0 %v773
    %v1734 = vpop.f32.mrf.mxu0
    %v1735 = vadd.f32 %v1566, %v1734
    %v1736 = vpop.f32.mrf.mxu0
    %v1737 = vadd.f32 %v1568, %v1736
    %1738 = vmatmul.bf16.gmra.mxu0 %v777
    %v1739 = vpop.f32.mrf.mxu0
    %v1740 = vadd.f32 %v1571, %v1739
    %v1741 = vpop.f32.mrf.mxu0
    %v1742 = vadd.f32 %v1573, %v1741
    %1743 = vmatmul.bf16.gmra.mxu0 %v781
    %v1744 = vpop.f32.mrf.mxu0
    %v1745 = vadd.f32 %v1576, %v1744
    %v1746 = vpop.f32.mrf.mxu0
    %v1747 = vadd.f32 %v1578, %v1746
    %1748 = vmatmul.bf16.gmra.mxu0 %v785
    %v1749 = vpop.f32.mrf.mxu0
    %v1750 = vadd.f32 %v1581, %v1749
    %v1751 = vpop.f32.mrf.mxu0
    %v1752 = vadd.f32 %v1583, %v1751
    %1753 = vmatmul.bf16.gmra.mxu0 %v789
    %v1754 = vpop.f32.mrf.mxu0
    %v1755 = vadd.f32 %v1586, %v1754
    %v1756 = vpop.f32.mrf.mxu0
    %v1757 = vadd.f32 %v1588, %v1756
    %1758 = vmatmul.bf16.gmra.mxu0 %v793
    %v1759 = vpop.f32.mrf.mxu0
    %v1760 = vadd.f32 %v1591, %v1759
    %v1761 = vpop.f32.mrf.mxu0
    %v1762 = vadd.f32 %v1593, %v1761
    %1763 = vmatmul.bf16.gmra.mxu0 %v797
    %v1764 = vpop.f32.mrf.mxu0
    %v1765 = vadd.f32 %v1596, %v1764
    %v1766 = vpop.f32.mrf.mxu0
    %v1767 = vadd.f32 %v1598, %v1766
    %1768 = vmatmul.bf16.gmra.mxu0 %v801
    %v1769 = vpop.f32.mrf.mxu0
    %v1770 = vadd.f32 %v1601, %v1769
    %v1771 = vpop.f32.mrf.mxu0
    %v1772 = vadd.f32 %v1603, %v1771
    %1773 = vmatmul.bf16.gmra.mxu0 %v805
    %v1774 = vpop.f32.mrf.mxu0
    %v1775 = vadd.f32 %v1606, %v1774
    %v1776 = vpop.f32.mrf.mxu0
    %v1777 = vadd.f32 %v1608, %v1776
    %1778 = vmatmul.bf16.gmra.mxu0 %v809
    %v1779 = vpop.f32.mrf.mxu0
    %v1780 = vadd.f32 %v1611, %v1779
    %v1781 = vpop.f32.mrf.mxu0
    %v1782 = vadd.f32 %v1613, %v1781
    %1783 = vmatmul.bf16.gmra.mxu0 %v813
    %v1784 = vpop.f32.mrf.mxu0
    %v1785 = vadd.f32 %v1616, %v1784
    %v1786 = vpop.f32.mrf.mxu0
    %v1787 = vadd.f32 %v1618, %v1786
    %1788 = vmatmul.bf16.gmra.mxu0 %v817
    %v1789 = vpop.f32.mrf.mxu0
    %v1790 = vadd.f32 %v1621, %v1789
    %v1791 = vpop.f32.mrf.mxu0
    %v1792 = vadd.f32 %v1623, %v1791
    %1793 = vmatmul.bf16.gmra.mxu0 %v821
    %v1794 = vpop.f32.mrf.mxu0
    %v1795 = vadd.f32 %v1626, %v1794
    %v1796 = vpop.f32.mrf.mxu0
    %v1797 = vadd.f32 %v1628, %v1796
    %1798 = vmatmul.bf16.gmra.mxu0 %v825
    %v1799 = vpop.f32.mrf.mxu0
    %v1800 = vadd.f32 %v1631, %v1799
    %v1801 = vpop.f32.mrf.mxu0
    %v1802 = vadd.f32 %v1633, %v1801
    %1803 = vmatmul.bf16.gmra.mxu0 %v829
    %v1804 = vpop.f32.mrf.mxu0
    %v1805 = vadd.f32 %v1636, %v1804
    %v1806 = vpop.f32.mrf.mxu0
    %v1807 = vadd.f32 %v1638, %v1806
    %1808 = vmatmul.bf16.gmra.mxu0 %v833
    %v1809 = vpop.f32.mrf.mxu0
    %v1810 = vadd.f32 %v1641, %v1809
    %v1811 = vpop.f32.mrf.mxu0
    %v1812 = vadd.f32 %v1643, %v1811
    %1813 = vmatmul.bf16.gmra.mxu0 %v837
    %v1814 = vpop.f32.mrf.mxu0
    %v1815 = vadd.f32 %v1646, %v1814
    %v1816 = vpop.f32.mrf.mxu0
    %v1817 = vadd.f32 %v1648, %v1816
    %1818 = vmatmul.bf16.gmra.mxu0 %v841
    %v1819 = vpop.f32.mrf.mxu0
    %v1820 = vadd.f32 %v1651, %v1819
    %v1821 = vpop.f32.mrf.mxu0
    %v1822 = vadd.f32 %v1653, %v1821
    %1823 = vmatmul.bf16.gmra.mxu0 %v845
    %v1824 = vpop.f32.mrf.mxu0
    %v1825 = vadd.f32 %v1656, %v1824
    %v1826 = vpop.f32.mrf.mxu0
    %v1827 = vadd.f32 %v1658, %v1826
    %1828 = vmatmul.bf16.gmra.mxu0 %v849
    %v1829 = vpop.f32.mrf.mxu0
    %v1830 = vadd.f32 %v1661, %v1829
    %v1831 = vpop.f32.mrf.mxu0
    %v1832 = vadd.f32 %v1663, %v1831
    %1833 = vmatmul.bf16.gmra.mxu0 %v853
    %v1834 = vpop.f32.mrf.mxu0
    %v1835 = vadd.f32 %v1666, %v1834
    %v1836 = vpop.f32.mrf.mxu0
    %v1837 = vadd.f32 %v1668, %v1836
    %1838 = vmatmul.bf16.gmra.mxu0 %v857
    %v1839 = vpop.f32.mrf.mxu0
    %v1840 = vadd.f32 %v1671, %v1839
    %v1841 = vpop.f32.mrf.mxu0
    %v1842 = vadd.f32 %v1673, %v1841
    %1843 = vmatmul.bf16.gmra.mxu0 %v861
    %v1844 = vpop.f32.mrf.mxu0
    %v1845 = vadd.f32 %v1676, %v1844
    %v1846 = vpop.f32.mrf.mxu0
    %v1847 = vadd.f32 %v1678, %v1846
    %1848 = vmatmul.bf16.gmra.mxu0 %v865
    %v1849 = vpop.f32.mrf.mxu0
    %v1850 = vadd.f32 %v1681, %v1849
    %v1851 = vpop.f32.mrf.mxu0
    %v1852 = vadd.f32 %v1683, %v1851
    %1853 = vmatmul.bf16.gmra.mxu0 %v869
    %v1854 = vpop.f32.mrf.mxu0
    %v1855 = vadd.f32 %v1686, %v1854
    %v1856 = vpop.f32.mrf.mxu0
    %v1857 = vadd.f32 %v1688, %v1856
    %1858 = vmatmul.bf16.gmra.mxu0 %v873
    %v1859 = vpop.f32.mrf.mxu0
    %v1860 = vadd.f32 %v1691, %v1859
    %v1861 = vpop.f32.mrf.mxu0
    %v1862 = vadd.f32 %v1693, %v1861
    %1863 = vmatmul.bf16.gmra.mxu0 %v877
    %v1864 = vpop.f32.mrf.mxu0
    %v1865 = vadd.f32 %v1696, %v1864
    %v1866 = vpop.f32.mrf.mxu0
    %v1867 = vadd.f32 %v1698, %v1866
    %1868 = vmatmul.bf16.gmra.mxu0 %v881
    %v1869 = vpop.f32.mrf.mxu0
    %v1870 = vadd.f32 %v1701, %v1869
    %v1871 = vpop.f32.mrf.mxu0
    %v1872 = vadd.f32 %v1703, %v1871
    %1873 = vmatmul.bf16.gmra.mxu0 %v885
    %v1874 = vpop.f32.mrf.mxu0
    %v1875 = vadd.f32 %v1706, %v1874
    %v1876 = vpop.f32.mrf.mxu0
    %v1877 = vadd.f32 %v1708, %v1876
    %1878 = vmatmul.bf16.gmra.mxu0 %v889
    %v1879 = vpop.f32.mrf.mxu0
    %v1880 = vadd.f32 %v1711, %v1879
    %v1881 = vpop.f32.mrf.mxu0
    %v1882 = vadd.f32 %v1713, %v1881
    %1883 = vmatmul.bf16.gmra.mxu0 %v893
    %v1884 = vpop.f32.mrf.mxu0
    %v1885 = vadd.f32 %v1716, %v1884
    %v1886 = vpop.f32.mrf.mxu0
    %v1887 = vadd.f32 %v1718, %v1886
    %1888 = vmatmul.bf16.gmra.mxu0 %v897
    %v1889 = vpop.f32.mrf.mxu0
    %v1890 = vadd.f32 %v1721, %v1889
    %v1891 = vpop.f32.mrf.mxu0
    %v1892 = vadd.f32 %v1723, %v1891
    %1893 = vdwg.mxu0
    %v1894 = vadd.f32 %v130, %v1735
    %v1895 = vadd.f32 %v131, %v1737
    %v1896 = vadd.f32 %v132, %v1740
    %v1897 = vadd.f32 %v133, %v1742
    %v1898 = vadd.f32 %v134, %v1745
    %v1899 = vadd.f32 %v135, %v1747
    %v1900 = vadd.f32 %v136, %v1750
    %v1901 = vadd.f32 %v137, %v1752
    %v1902 = vadd.f32 %v138, %v1755
    %v1903 = vadd.f32 %v139, %v1757
    %v1904 = vadd.f32 %v140, %v1760
    %v1905 = vadd.f32 %v141, %v1762
    %v1906 = vadd.f32 %v142, %v1765
    %v1907 = vadd.f32 %v143, %v1767
    %v1908 = vadd.f32 %v144, %v1770
    %v1909 = vadd.f32 %v145, %v1772
    %v1910 = vadd.f32 %v146, %v1775
    %v1911 = vadd.f32 %v147, %v1777
    %v1912 = vadd.f32 %v148, %v1780
    %v1913 = vadd.f32 %v149, %v1782
    %v1914 = vadd.f32 %v150, %v1785
    %v1915 = vadd.f32 %v151, %v1787
    %v1916 = vadd.f32 %v152, %v1790
    %v1917 = vadd.f32 %v153, %v1792
    %v1918 = vadd.f32 %v154, %v1795
    %v1919 = vadd.f32 %v155, %v1797
    %v1920 = vadd.f32 %v156, %v1800
    %v1921 = vadd.f32 %v157, %v1802
    %v1922 = vadd.f32 %v158, %v1805
    %v1923 = vadd.f32 %v159, %v1807
    %v1924 = vadd.f32 %v160, %v1810
    %v1925 = vadd.f32 %v161, %v1812
    %v1926 = vadd.f32 %v162, %v1815
    %v1927 = vadd.f32 %v163, %v1817
    %v1928 = vadd.f32 %v164, %v1820
    %v1929 = vadd.f32 %v165, %v1822
    %v1930 = vadd.f32 %v166, %v1825
    %v1931 = vadd.f32 %v167, %v1827
    %v1932 = vadd.f32 %v168, %v1830
    %v1933 = vadd.f32 %v169, %v1832
    %v1934 = vadd.f32 %v170, %v1835
    %v1935 = vadd.f32 %v171, %v1837
    %v1936 = vadd.f32 %v172, %v1840
    %v1937 = vadd.f32 %v173, %v1842
    %v1938 = vadd.f32 %v174, %v1845
    %v1939 = vadd.f32 %v175, %v1847
    %v1940 = vadd.f32 %v176, %v1850
    %v1941 = vadd.f32 %v177, %v1852
    %v1942 = vadd.f32 %v178, %v1855
    %v1943 = vadd.f32 %v179, %v1857
    %v1944 = vadd.f32 %v180, %v1860
    %v1945 = vadd.f32 %v181, %v1862
    %v1946 = vadd.f32 %v182, %v1865
    %v1947 = vadd.f32 %v183, %v1867
    %v1948 = vadd.f32 %v184, %v1870
    %v1949 = vadd.f32 %v185, %v1872
    %v1950 = vadd.f32 %v186, %v1875
    %v1951 = vadd.f32 %v187, %v1877
    %v1952 = vadd.f32 %v188, %v1880
    %v1953 = vadd.f32 %v189, %v1882
    %v1954 = vadd.f32 %v190, %v1885
    %v1955 = vadd.f32 %v191, %v1887
    %v1956 = vadd.f32 %v192, %v1890
    %v1957 = vadd.f32 %v193, %v1892
    %1958 = vst [vmem:[#allocation2] sm:$0xff] %v1894
    %1959 = vst [vmem:[#allocation2 + $0x8] sm:$0xff] %v1895
    %1960 = vst [vmem:[#allocation2 + $0x10] sm:$0xff] %v1896
    %1961 = vst [vmem:[#allocation2 + $0x18] sm:$0xff] %v1897
    %1962 = vst [vmem:[#allocation2 + $0x20] sm:$0xff] %v1898
    %1963 = vst [vmem:[#allocation2 + $0x28] sm:$0xff] %v1899
    %1964 = vst [vmem:[#allocation2 + $0x30] sm:$0xff] %v1900
    %1965 = vst [vmem:[#allocation2 + $0x38] sm:$0xff] %v1901
    %1966 = vst [vmem:[#allocation2 + $0x40] sm:$0xff] %v1902
    %1967 = vst [vmem:[#allocation2 + $0x48] sm:$0xff] %v1903
    %1968 = vst [vmem:[#allocation2 + $0x50] sm:$0xff] %v1904
    %1969 = vst [vmem:[#allocation2 + $0x58] sm:$0xff] %v1905
    %1970 = vst [vmem:[#allocation2 + $0x60] sm:$0xff] %v1906
    %1971 = vst [vmem:[#allocation2 + $0x68] sm:$0xff] %v1907
    %1972 = vst [vmem:[#allocation2 + $0x70] sm:$0xff] %v1908
    %1973 = vst [vmem:[#allocation2 + $0x78] sm:$0xff] %v1909
    %1974 = vst [vmem:[#allocation2 + $0x80] sm:$0xff] %v1910
    %1975 = vst [vmem:[#allocation2 + $0x88] sm:$0xff] %v1911
    %1976 = vst [vmem:[#allocation2 + $0x90] sm:$0xff] %v1912
    %1977 = vst [vmem:[#allocation2 + $0x98] sm:$0xff] %v1913
    %1978 = vst [vmem:[#allocation2 + $0xa0] sm:$0xff] %v1914
    %1979 = vst [vmem:[#allocation2 + $0xa8] sm:$0xff] %v1915
    %1980 = vst [vmem:[#allocation2 + $0xb0] sm:$0xff] %v1916
    %1981 = vst [vmem:[#allocation2 + $0xb8] sm:$0xff] %v1917
    %1982 = vst [vmem:[#allocation2 + $0xc0] sm:$0xff] %v1918
    %1983 = vst [vmem:[#allocation2 + $0xc8] sm:$0xff] %v1919
    %1984 = vst [vmem:[#allocation2 + $0xd0] sm:$0xff] %v1920
    %1985 = vst [vmem:[#allocation2 + $0xd8] sm:$0xff] %v1921
    %1986 = vst [vmem:[#allocation2 + $0xe0] sm:$0xff] %v1922
    %1987 = vst [vmem:[#allocation2 + $0xe8] sm:$0xff] %v1923
    %1988 = vst [vmem:[#allocation2 + $0xf0] sm:$0xff] %v1924
    %1989 = vst [vmem:[#allocation2 + $0xf8] sm:$0xff] %v1925
    %1990 = vst [vmem:[#allocation2 + $0x100] sm:$0xff] %v1926
    %1991 = vst [vmem:[#allocation2 + $0x108] sm:$0xff] %v1927
    %1992 = vst [vmem:[#allocation2 + $0x110] sm:$0xff] %v1928
    %1993 = vst [vmem:[#allocation2 + $0x118] sm:$0xff] %v1929
    %1994 = vst [vmem:[#allocation2 + $0x120] sm:$0xff] %v1930
    %1995 = vst [vmem:[#allocation2 + $0x128] sm:$0xff] %v1931
    %1996 = vst [vmem:[#allocation2 + $0x130] sm:$0xff] %v1932
    %1997 = vst [vmem:[#allocation2 + $0x138] sm:$0xff] %v1933
    %1998 = vst [vmem:[#allocation2 + $0x140] sm:$0xff] %v1934
    %1999 = vst [vmem:[#allocation2 + $0x148] sm:$0xff] %v1935
    %2000 = vst [vmem:[#allocation2 + $0x150] sm:$0xff] %v1936
    %2001 = vst [vmem:[#allocation2 + $0x158] sm:$0xff] %v1937
    %2002 = vst [vmem:[#allocation2 + $0x160] sm:$0xff] %v1938
    %2003 = vst [vmem:[#allocation2 + $0x168] sm:$0xff] %v1939
    %2004 = vst [vmem:[#allocation2 + $0x170] sm:$0xff] %v1940
    %2005 = vst [vmem:[#allocation2 + $0x178] sm:$0xff] %v1941
    %2006 = vst [vmem:[#allocation2 + $0x180] sm:$0xff] %v1942
    %2007 = vst [vmem:[#allocation2 + $0x188] sm:$0xff] %v1943
    %2008 = vst [vmem:[#allocation2 + $0x190] sm:$0xff] %v1944
    %2009 = vst [vmem:[#allocation2 + $0x198] sm:$0xff] %v1945
    %2010 = vst [vmem:[#allocation2 + $0x1a0] sm:$0xff] %v1946
    %2011 = vst [vmem:[#allocation2 + $0x1a8] sm:$0xff] %v1947
    %2012 = vst [vmem:[#allocation2 + $0x1b0] sm:$0xff] %v1948
    %2013 = vst [vmem:[#allocation2 + $0x1b8] sm:$0xff] %v1949
    %2014 = vst [vmem:[#allocation2 + $0x1c0] sm:$0xff] %v1950
    %2015 = vst [vmem:[#allocation2 + $0x1c8] sm:$0xff] %v1951
    %2016 = vst [vmem:[#allocation2 + $0x1d0] sm:$0xff] %v1952
    %2017 = vst [vmem:[#allocation2 + $0x1d8] sm:$0xff] %v1953
    %2018 = vst [vmem:[#allocation2 + $0x1e0] sm:$0xff] %v1954
    %2019 = vst [vmem:[#allocation2 + $0x1e8] sm:$0xff] %v1955
    %2020 = vst [vmem:[#allocation2 + $0x1f0] sm:$0xff] %v1956
    %2021 = vst [vmem:[#allocation2 + $0x1f8] sm:$0xff] %v1957
    // Predicated region
    $region30: #{tpu_custom_call.1} parent=1 // pred_check
      %p2022 = pneg %p62
    $region31: #{tpu_custom_call.1} parent=1 // pred_check_branch
      %2024 = sbr.rel (%p2022) target = $region33
    $region32: #{tpu_custom_call.1} parent=1 // pred_region
      %v2025 = vld [vmem:[#allocation2] sm:$0xff]
      %v2026 = vld [vmem:[#allocation2 + $0x8] sm:$0xff]
      %v2027 = vld [vmem:[#allocation2 + $0x10] sm:$0xff]
      %v2028 = vld [vmem:[#allocation2 + $0x18] sm:$0xff]
      %v2029 = vld [vmem:[#allocation2 + $0x20] sm:$0xff]
      %v2030 = vld [vmem:[#allocation2 + $0x28] sm:$0xff]
      %v2031 = vld [vmem:[#allocation2 + $0x30] sm:$0xff]
      %v2032 = vld [vmem:[#allocation2 + $0x38] sm:$0xff]
      %v2033 = vld [vmem:[#allocation2 + $0x40] sm:$0xff]
      %v2034 = vld [vmem:[#allocation2 + $0x48] sm:$0xff]
      %v2035 = vld [vmem:[#allocation2 + $0x50] sm:$0xff]
      %v2036 = vld [vmem:[#allocation2 + $0x58] sm:$0xff]
      %v2037 = vld [vmem:[#allocation2 + $0x60] sm:$0xff]
      %v2038 = vld [vmem:[#allocation2 + $0x68] sm:$0xff]
      %v2039 = vld [vmem:[#allocation2 + $0x70] sm:$0xff]
      %v2040 = vld [vmem:[#allocation2 + $0x78] sm:$0xff]
      %v2041 = vld [vmem:[#allocation2 + $0x80] sm:$0xff]
      %v2042 = vld [vmem:[#allocation2 + $0x88] sm:$0xff]
      %v2043 = vld [vmem:[#allocation2 + $0x90] sm:$0xff]
      %v2044 = vld [vmem:[#allocation2 + $0x98] sm:$0xff]
      %v2045 = vld [vmem:[#allocation2 + $0xa0] sm:$0xff]
      %v2046 = vld [vmem:[#allocation2 + $0xa8] sm:$0xff]
      %v2047 = vld [vmem:[#allocation2 + $0xb0] sm:$0xff]
      %v2048 = vld [vmem:[#allocation2 + $0xb8] sm:$0xff]
      %v2049 = vld [vmem:[#allocation2 + $0xc0] sm:$0xff]
      %v2050 = vld [vmem:[#allocation2 + $0xc8] sm:$0xff]
      %v2051 = vld [vmem:[#allocation2 + $0xd0] sm:$0xff]
      %v2052 = vld [vmem:[#allocation2 + $0xd8] sm:$0xff]
      %v2053 = vld [vmem:[#allocation2 + $0xe0] sm:$0xff]
      %v2054 = vld [vmem:[#allocation2 + $0xe8] sm:$0xff]
      %v2055 = vld [vmem:[#allocation2 + $0xf0] sm:$0xff]
      %v2056 = vld [vmem:[#allocation2 + $0xf8] sm:$0xff]
      %v2057 = vld [vmem:[#allocation2 + $0x100] sm:$0xff]
      %v2058 = vld [vmem:[#allocation2 + $0x108] sm:$0xff]
      %v2059 = vld [vmem:[#allocation2 + $0x110] sm:$0xff]
      %v2060 = vld [vmem:[#allocation2 + $0x118] sm:$0xff]
      %v2061 = vld [vmem:[#allocation2 + $0x120] sm:$0xff]
      %v2062 = vld [vmem:[#allocation2 + $0x128] sm:$0xff]
      %v2063 = vld [vmem:[#allocation2 + $0x130] sm:$0xff]
      %v2064 = vld [vmem:[#allocation2 + $0x138] sm:$0xff]
      %v2065 = vld [vmem:[#allocation2 + $0x140] sm:$0xff]
      %v2066 = vld [vmem:[#allocation2 + $0x148] sm:$0xff]
      %v2067 = vld [vmem:[#allocation2 + $0x150] sm:$0xff]
      %v2068 = vld [vmem:[#allocation2 + $0x158] sm:$0xff]
      %v2069 = vld [vmem:[#allocation2 + $0x160] sm:$0xff]
      %v2070 = vld [vmem:[#allocation2 + $0x168] sm:$0xff]
      %v2071 = vld [vmem:[#allocation2 + $0x170] sm:$0xff]
      %v2072 = vld [vmem:[#allocation2 + $0x178] sm:$0xff]
      %v2073 = vld [vmem:[#allocation2 + $0x180] sm:$0xff]
      %v2074 = vld [vmem:[#allocation2 + $0x188] sm:$0xff]
      %v2075 = vld [vmem:[#allocation2 + $0x190] sm:$0xff]
      %v2076 = vld [vmem:[#allocation2 + $0x198] sm:$0xff]
      %v2077 = vld [vmem:[#allocation2 + $0x1a0] sm:$0xff]
      %v2078 = vld [vmem:[#allocation2 + $0x1a8] sm:$0xff]
      %v2079 = vld [vmem:[#allocation2 + $0x1b0] sm:$0xff]
      %v2080 = vld [vmem:[#allocation2 + $0x1b8] sm:$0xff]
      %v2081 = vld [vmem:[#allocation2 + $0x1c0] sm:$0xff]
      %v2082 = vld [vmem:[#allocation2 + $0x1c8] sm:$0xff]
      %v2083 = vld [vmem:[#allocation2 + $0x1d0] sm:$0xff]
      %v2084 = vld [vmem:[#allocation2 + $0x1d8] sm:$0xff]
      %v2085 = vld [vmem:[#allocation2 + $0x1e0] sm:$0xff]
      %v2086 = vld [vmem:[#allocation2 + $0x1e8] sm:$0xff]
      %v2087 = vld [vmem:[#allocation2 + $0x1f0] sm:$0xff]
      %v2088 = vld [vmem:[#allocation2 + $0x1f8] sm:$0xff]
      %v2089 = vld [vmem:[#allocation8] sm:$0xff]
      %v2090 = vld [vmem:[#allocation8 + $0x8] sm:$0xff]
      %v2091 = vld [vmem:[#allocation8 + $0x10] sm:$0xff]
      %v2092 = vld [vmem:[#allocation8 + $0x18] sm:$0xff]
      %v2093 = vld [vmem:[#allocation8 + $0x20] sm:$0xff]
      %v2094 = vld [vmem:[#allocation8 + $0x28] sm:$0xff]
      %v2095 = vld [vmem:[#allocation8 + $0x30] sm:$0xff]
      %v2096 = vld [vmem:[#allocation8 + $0x38] sm:$0xff]
      %v2097 = vld [vmem:[#allocation8 + $0x40] sm:$0xff]
      %v2098 = vld [vmem:[#allocation8 + $0x48] sm:$0xff]
      %v2099 = vld [vmem:[#allocation8 + $0x50] sm:$0xff]
      %v2100 = vld [vmem:[#allocation8 + $0x58] sm:$0xff]
      %v2101 = vld [vmem:[#allocation8 + $0x60] sm:$0xff]
      %v2102 = vld [vmem:[#allocation8 + $0x68] sm:$0xff]
      %v2103 = vld [vmem:[#allocation8 + $0x70] sm:$0xff]
      %v2104 = vld [vmem:[#allocation8 + $0x78] sm:$0xff]
      %v2105 = vld [vmem:[#allocation8 + $0x80] sm:$0xff]
      %v2106 = vld [vmem:[#allocation8 + $0x88] sm:$0xff]
      %v2107 = vld [vmem:[#allocation8 + $0x90] sm:$0xff]
      %v2108 = vld [vmem:[#allocation8 + $0x98] sm:$0xff]
      %v2109 = vld [vmem:[#allocation8 + $0xa0] sm:$0xff]
      %v2110 = vld [vmem:[#allocation8 + $0xa8] sm:$0xff]
      %v2111 = vld [vmem:[#allocation8 + $0xb0] sm:$0xff]
      %v2112 = vld [vmem:[#allocation8 + $0xb8] sm:$0xff]
      %v2113 = vld [vmem:[#allocation8 + $0xc0] sm:$0xff]
      %v2114 = vld [vmem:[#allocation8 + $0xc8] sm:$0xff]
      %v2115 = vld [vmem:[#allocation8 + $0xd0] sm:$0xff]
      %v2116 = vld [vmem:[#allocation8 + $0xd8] sm:$0xff]
      %v2117 = vld [vmem:[#allocation8 + $0xe0] sm:$0xff]
      %v2118 = vld [vmem:[#allocation8 + $0xe8] sm:$0xff]
      %v2119 = vld [vmem:[#allocation8 + $0xf0] sm:$0xff]
      %v2120 = vld [vmem:[#allocation8 + $0xf8] sm:$0xff]
      %v2121 = vld [vmem:[#allocation8 + $0x100] sm:$0xff]
      %v2122 = vld [vmem:[#allocation8 + $0x108] sm:$0xff]
      %v2123 = vld [vmem:[#allocation8 + $0x110] sm:$0xff]
      %v2124 = vld [vmem:[#allocation8 + $0x118] sm:$0xff]
      %v2125 = vld [vmem:[#allocation8 + $0x120] sm:$0xff]
      %v2126 = vld [vmem:[#allocation8 + $0x128] sm:$0xff]
      %v2127 = vld [vmem:[#allocation8 + $0x130] sm:$0xff]
      %v2128 = vld [vmem:[#allocation8 + $0x138] sm:$0xff]
      %v2129 = vld [vmem:[#allocation8 + $0x140] sm:$0xff]
      %v2130 = vld [vmem:[#allocation8 + $0x148] sm:$0xff]
      %v2131 = vld [vmem:[#allocation8 + $0x150] sm:$0xff]
      %v2132 = vld [vmem:[#allocation8 + $0x158] sm:$0xff]
      %v2133 = vld [vmem:[#allocation8 + $0x160] sm:$0xff]
      %v2134 = vld [vmem:[#allocation8 + $0x168] sm:$0xff]
      %v2135 = vld [vmem:[#allocation8 + $0x170] sm:$0xff]
      %v2136 = vld [vmem:[#allocation8 + $0x178] sm:$0xff]
      %v2137 = vld [vmem:[#allocation8 + $0x180] sm:$0xff]
      %v2138 = vld [vmem:[#allocation8 + $0x188] sm:$0xff]
      %v2139 = vld [vmem:[#allocation8 + $0x190] sm:$0xff]
      %v2140 = vld [vmem:[#allocation8 + $0x198] sm:$0xff]
      %v2141 = vld [vmem:[#allocation8 + $0x1a0] sm:$0xff]
      %v2142 = vld [vmem:[#allocation8 + $0x1a8] sm:$0xff]
      %v2143 = vld [vmem:[#allocation8 + $0x1b0] sm:$0xff]
      %v2144 = vld [vmem:[#allocation8 + $0x1b8] sm:$0xff]
      %v2145 = vld [vmem:[#allocation8 + $0x1c0] sm:$0xff]
      %v2146 = vld [vmem:[#allocation8 + $0x1c8] sm:$0xff]
      %v2147 = vld [vmem:[#allocation8 + $0x1d0] sm:$0xff]
      %v2148 = vld [vmem:[#allocation8 + $0x1d8] sm:$0xff]
      %v2149 = vld [vmem:[#allocation8 + $0x1e0] sm:$0xff]
      %v2150 = vld [vmem:[#allocation8 + $0x1e8] sm:$0xff]
      %v2151 = vld [vmem:[#allocation8 + $0x1f0] sm:$0xff]
      %v2152 = vld [vmem:[#allocation8 + $0x1f8] sm:$0xff]
      %v2153 = vadd.f32 %v2025, %v2089
      %v2154 = vadd.f32 %v2026, %v2090
      %v2155 = vadd.f32 %v2027, %v2091
      %v2156 = vadd.f32 %v2028, %v2092
      %v2157 = vadd.f32 %v2029, %v2093
      %v2158 = vadd.f32 %v2030, %v2094
      %v2159 = vadd.f32 %v2031, %v2095
      %v2160 = vadd.f32 %v2032, %v2096
      %v2161 = vadd.f32 %v2033, %v2097
      %v2162 = vadd.f32 %v2034, %v2098
      %v2163 = vadd.f32 %v2035, %v2099
      %v2164 = vadd.f32 %v2036, %v2100
      %v2165 = vadd.f32 %v2037, %v2101
      %v2166 = vadd.f32 %v2038, %v2102
      %v2167 = vadd.f32 %v2039, %v2103
      %v2168 = vadd.f32 %v2040, %v2104
      %v2169 = vadd.f32 %v2041, %v2105
      %v2170 = vadd.f32 %v2042, %v2106
      %v2171 = vadd.f32 %v2043, %v2107
      %v2172 = vadd.f32 %v2044, %v2108
      %v2173 = vadd.f32 %v2045, %v2109
      %v2174 = vadd.f32 %v2046, %v2110
      %v2175 = vadd.f32 %v2047, %v2111
      %v2176 = vadd.f32 %v2048, %v2112
      %v2177 = vadd.f32 %v2049, %v2113
      %v2178 = vadd.f32 %v2050, %v2114
      %v2179 = vadd.f32 %v2051, %v2115
      %v2180 = vadd.f32 %v2052, %v2116
      %v2181 = vadd.f32 %v2053, %v2117
      %v2182 = vadd.f32 %v2054, %v2118
      %v2183 = vadd.f32 %v2055, %v2119
      %v2184 = vadd.f32 %v2056, %v2120
      %v2185 = vadd.f32 %v2057, %v2121
      %v2186 = vadd.f32 %v2058, %v2122
      %v2187 = vadd.f32 %v2059, %v2123
      %v2188 = vadd.f32 %v2060, %v2124
      %v2189 = vadd.f32 %v2061, %v2125
      %v2190 = vadd.f32 %v2062, %v2126
      %v2191 = vadd.f32 %v2063, %v2127
      %v2192 = vadd.f32 %v2064, %v2128
      %v2193 = vadd.f32 %v2065, %v2129
      %v2194 = vadd.f32 %v2066, %v2130
      %v2195 = vadd.f32 %v2067, %v2131
      %v2196 = vadd.f32 %v2068, %v2132
      %v2197 = vadd.f32 %v2069, %v2133
      %v2198 = vadd.f32 %v2070, %v2134
      %v2199 = vadd.f32 %v2071, %v2135
      %v2200 = vadd.f32 %v2072, %v2136
      %v2201 = vadd.f32 %v2073, %v2137
      %v2202 = vadd.f32 %v2074, %v2138
      %v2203 = vadd.f32 %v2075, %v2139
      %v2204 = vadd.f32 %v2076, %v2140
      %v2205 = vadd.f32 %v2077, %v2141
      %v2206 = vadd.f32 %v2078, %v2142
      %v2207 = vadd.f32 %v2079, %v2143
      %v2208 = vadd.f32 %v2080, %v2144
      %v2209 = vadd.f32 %v2081, %v2145
      %v2210 = vadd.f32 %v2082, %v2146
      %v2211 = vadd.f32 %v2083, %v2147
      %v2212 = vadd.f32 %v2084, %v2148
      %v2213 = vadd.f32 %v2085, %v2149
      %v2214 = vadd.f32 %v2086, %v2150
      %v2215 = vadd.f32 %v2087, %v2151
      %v2216 = vadd.f32 %v2088, %v2152
      %v2217 = vpack.c.bf16 %v2153, %v2153
      %v2218 = vpack.c.bf16 %v2154, %v2154
      %v2219 = vpack.c.bf16 %v2155, %v2155
      %v2220 = vpack.c.bf16 %v2156, %v2156
      %v2221 = vpack.c.bf16 %v2157, %v2157
      %v2222 = vpack.c.bf16 %v2158, %v2158
      %v2223 = vpack.c.bf16 %v2159, %v2159
      %v2224 = vpack.c.bf16 %v2160, %v2160
      %v2225 = vpack.c.bf16 %v2161, %v2161
      %v2226 = vpack.c.bf16 %v2162, %v2162
      %v2227 = vpack.c.bf16 %v2163, %v2163
      %v2228 = vpack.c.bf16 %v2164, %v2164
      %v2229 = vpack.c.bf16 %v2165, %v2165
      %v2230 = vpack.c.bf16 %v2166, %v2166
      %v2231 = vpack.c.bf16 %v2167, %v2167
      %v2232 = vpack.c.bf16 %v2168, %v2168
      %v2233 = vpack.c.bf16 %v2169, %v2169
      %v2234 = vpack.c.bf16 %v2170, %v2170
      %v2235 = vpack.c.bf16 %v2171, %v2171
      %v2236 = vpack.c.bf16 %v2172, %v2172
      %v2237 = vpack.c.bf16 %v2173, %v2173
      %v2238 = vpack.c.bf16 %v2174, %v2174
      %v2239 = vpack.c.bf16 %v2175, %v2175
      %v2240 = vpack.c.bf16 %v2176, %v2176
      %v2241 = vpack.c.bf16 %v2177, %v2177
      %v2242 = vpack.c.bf16 %v2178, %v2178
      %v2243 = vpack.c.bf16 %v2179, %v2179
      %v2244 = vpack.c.bf16 %v2180, %v2180
      %v2245 = vpack.c.bf16 %v2181, %v2181
      %v2246 = vpack.c.bf16 %v2182, %v2182
      %v2247 = vpack.c.bf16 %v2183, %v2183
      %v2248 = vpack.c.bf16 %v2184, %v2184
      %v2249 = vpack.c.bf16 %v2185, %v2185
      %v2250 = vpack.c.bf16 %v2186, %v2186
      %v2251 = vpack.c.bf16 %v2187, %v2187
      %v2252 = vpack.c.bf16 %v2188, %v2188
      %v2253 = vpack.c.bf16 %v2189, %v2189
      %v2254 = vpack.c.bf16 %v2190, %v2190
      %v2255 = vpack.c.bf16 %v2191, %v2191
      %v2256 = vpack.c.bf16 %v2192, %v2192
      %v2257 = vpack.c.bf16 %v2193, %v2193
      %v2258 = vpack.c.bf16 %v2194, %v2194
      %v2259 = vpack.c.bf16 %v2195, %v2195
      %v2260 = vpack.c.bf16 %v2196, %v2196
      %v2261 = vpack.c.bf16 %v2197, %v2197
      %v2262 = vpack.c.bf16 %v2198, %v2198
      %v2263 = vpack.c.bf16 %v2199, %v2199
      %v2264 = vpack.c.bf16 %v2200, %v2200
      %v2265 = vpack.c.bf16 %v2201, %v2201
      %v2266 = vpack.c.bf16 %v2202, %v2202
      %v2267 = vpack.c.bf16 %v2203, %v2203
      %v2268 = vpack.c.bf16 %v2204, %v2204
      %v2269 = vpack.c.bf16 %v2205, %v2205
      %v2270 = vpack.c.bf16 %v2206, %v2206
      %v2271 = vpack.c.bf16 %v2207, %v2207
      %v2272 = vpack.c.bf16 %v2208, %v2208
      %v2273 = vpack.c.bf16 %v2209, %v2209
      %v2274 = vpack.c.bf16 %v2210, %v2210
      %v2275 = vpack.c.bf16 %v2211, %v2211
      %v2276 = vpack.c.bf16 %v2212, %v2212
      %v2277 = vpack.c.bf16 %v2213, %v2213
      %v2278 = vpack.c.bf16 %v2214, %v2214
      %v2279 = vpack.c.bf16 %v2215, %v2215
      %v2280 = vpack.c.bf16 %v2216, %v2216
      %2281 = vst [vmem:[#allocation9] sm:$0xf] %v2217
      %2282 = vst [vmem:[#allocation9 + $0x4] sm:$0xf] %v2218
      %2283 = vst [vmem:[#allocation9 + $0x8] sm:$0xf] %v2219
      %2284 = vst [vmem:[#allocation9 + $0xc] sm:$0xf] %v2220
      %2285 = vst [vmem:[#allocation9 + $0x10] sm:$0xf] %v2221
      %2286 = vst [vmem:[#allocation9 + $0x14] sm:$0xf] %v2222
      %2287 = vst [vmem:[#allocation9 + $0x18] sm:$0xf] %v2223
      %2288 = vst [vmem:[#allocation9 + $0x1c] sm:$0xf] %v2224
      %2289 = vst [vmem:[#allocation9 + $0x20] sm:$0xf] %v2225
      %2290 = vst [vmem:[#allocation9 + $0x24] sm:$0xf] %v2226
      %2291 = vst [vmem:[#allocation9 + $0x28] sm:$0xf] %v2227
      %2292 = vst [vmem:[#allocation9 + $0x2c] sm:$0xf] %v2228
      %2293 = vst [vmem:[#allocation9 + $0x30] sm:$0xf] %v2229
      %2294 = vst [vmem:[#allocation9 + $0x34] sm:$0xf] %v2230
      %2295 = vst [vmem:[#allocation9 + $0x38] sm:$0xf] %v2231
      %2296 = vst [vmem:[#allocation9 + $0x3c] sm:$0xf] %v2232
      %2297 = vst [vmem:[#allocation9 + $0x40] sm:$0xf] %v2233
      %2298 = vst [vmem:[#allocation9 + $0x44] sm:$0xf] %v2234
      %2299 = vst [vmem:[#allocation9 + $0x48] sm:$0xf] %v2235
      %2300 = vst [vmem:[#allocation9 + $0x4c] sm:$0xf] %v2236
      %2301 = vst [vmem:[#allocation9 + $0x50] sm:$0xf] %v2237
      %2302 = vst [vmem:[#allocation9 + $0x54] sm:$0xf] %v2238
      %2303 = vst [vmem:[#allocation9 + $0x58] sm:$0xf] %v2239
      %2304 = vst [vmem:[#allocation9 + $0x5c] sm:$0xf] %v2240
      %2305 = vst [vmem:[#allocation9 + $0x60] sm:$0xf] %v2241
      %2306 = vst [vmem:[#allocation9 + $0x64] sm:$0xf] %v2242
      %2307 = vst [vmem:[#allocation9 + $0x68] sm:$0xf] %v2243
      %2308 = vst [vmem:[#allocation9 + $0x6c] sm:$0xf] %v2244
      %2309 = vst [vmem:[#allocation9 + $0x70] sm:$0xf] %v2245
      %2310 = vst [vmem:[#allocation9 + $0x74] sm:$0xf] %v2246
      %2311 = vst [vmem:[#allocation9 + $0x78] sm:$0xf] %v2247
      %2312 = vst [vmem:[#allocation9 + $0x7c] sm:$0xf] %v2248
      %2313 = vst [vmem:[#allocation9 + $0x80] sm:$0xf] %v2249
      %2314 = vst [vmem:[#allocation9 + $0x84] sm:$0xf] %v2250
      %2315 = vst [vmem:[#allocation9 + $0x88] sm:$0xf] %v2251
      %2316 = vst [vmem:[#allocation9 + $0x8c] sm:$0xf] %v2252
      %2317 = vst [vmem:[#allocation9 + $0x90] sm:$0xf] %v2253
      %2318 = vst [vmem:[#allocation9 + $0x94] sm:$0xf] %v2254
      %2319 = vst [vmem:[#allocation9 + $0x98] sm:$0xf] %v2255
      %2320 = vst [vmem:[#allocation9 + $0x9c] sm:$0xf] %v2256
      %2321 = vst [vmem:[#allocation9 + $0xa0] sm:$0xf] %v2257
      %2322 = vst [vmem:[#allocation9 + $0xa4] sm:$0xf] %v2258
      %2323 = vst [vmem:[#allocation9 + $0xa8] sm:$0xf] %v2259
      %2324 = vst [vmem:[#allocation9 + $0xac] sm:$0xf] %v2260
      %2325 = vst [vmem:[#allocation9 + $0xb0] sm:$0xf] %v2261
      %2326 = vst [vmem:[#allocation9 + $0xb4] sm:$0xf] %v2262
      %2327 = vst [vmem:[#allocation9 + $0xb8] sm:$0xf] %v2263
      %2328 = vst [vmem:[#allocation9 + $0xbc] sm:$0xf] %v2264
      %2329 = vst [vmem:[#allocation9 + $0xc0] sm:$0xf] %v2265
      %2330 = vst [vmem:[#allocation9 + $0xc4] sm:$0xf] %v2266
      %2331 = vst [vmem:[#allocation9 + $0xc8] sm:$0xf] %v2267
      %2332 = vst [vmem:[#allocation9 + $0xcc] sm:$0xf] %v2268
      %2333 = vst [vmem:[#allocation9 + $0xd0] sm:$0xf] %v2269
      %2334 = vst [vmem:[#allocation9 + $0xd4] sm:$0xf] %v2270
      %2335 = vst [vmem:[#allocation9 + $0xd8] sm:$0xf] %v2271
      %2336 = vst [vmem:[#allocation9 + $0xdc] sm:$0xf] %v2272
      %2337 = vst [vmem:[#allocation9 + $0xe0] sm:$0xf] %v2273
      %2338 = vst [vmem:[#allocation9 + $0xe4] sm:$0xf] %v2274
      %2339 = vst [vmem:[#allocation9 + $0xe8] sm:$0xf] %v2275
      %2340 = vst [vmem:[#allocation9 + $0xec] sm:$0xf] %v2276
      %2341 = vst [vmem:[#allocation9 + $0xf0] sm:$0xf] %v2277
      %2342 = vst [vmem:[#allocation9 + $0xf4] sm:$0xf] %v2278
      %2343 = vst [vmem:[#allocation9 + $0xf8] sm:$0xf] %v2279
      %2344 = vst [vmem:[#allocation9 + $0xfc] sm:$0xf] %v2280
    $region33: #{tpu_custom_call.1} parent=1 // pred_fallthru
      _
    // Predicated region
    $region34: #{tpu_custom_call.1} parent=1 // pred_check
      _
    $region35: #{tpu_custom_call.1} parent=1 // pred_check_branch
      %2346 = sbr.rel (0) target = $region37
    $region36: #{tpu_custom_call.1} parent=1 // pred_region
      %2348 = vsyncadd [#allocation5], 0
      %s2349 = sshll.u32 [#allocation9], 4
      %s2350 = int_to_ptr.vmem [resolvable:$true] %s2349
      %s2351 = sshll.u32 %s3, 4
      %s2352 = int_to_ptr.hbm [resolvable:$true] %s2351
      %2357 = dma.vmem_to_hbm [thread:$0]  %s2350, 4096, %s2352, [#allocation5], 64, 64, 4
    $region37: #{tpu_custom_call.1} parent=1 // pred_fallthru
      _
    // Predicated region
    $region38: #{tpu_custom_call.1} parent=1 // pred_check
      _
    $region39: #{tpu_custom_call.1} parent=1 // pred_check_branch
      %2359 = sbr.rel (0) target = $region41
    $region40: #{tpu_custom_call.1} parent=1 // pred_region
      %2361 = dma.done [#allocation5], 4096
    $region41: #{tpu_custom_call.1} parent=1 // pred_fallthru
      _
    %2362 = vsyncpa [#allocation4], 1
    %2363 = vsyncpa [#allocation7], 1
    %2364 = vsyncpa [#allocation5], 1

</llo_original>
